<compile_context>
chip_gen: v6e
topology: v6e:2x2x1
jax: 0.10.0
libtpu: 0.0.40
codegen_flags: <defaults>
</compile_context>

<pallas_src>
import functools

import jax
import jax.numpy as jnp
import numpy as np
from jax.experimental import pallas as pl
from jax.experimental.pallas import tpu as pltpu


_MXU_MIN_CHANNELS = 16   # below this the VPU channel-diagonal path wins


# --------------------------- kernel: VPU diag path ---------------------------
def _conv3x3_diag(cur, wd_ref, *, width, channels, pack):
    """3x3 'same' conv on a sublane-packed, lane-dense slab (pure VPU/XLU).

    cur    : (C*P, HW) f32 value; row [c*P + p] = channel c of packed elem p.
    wd_ref : (9*C, C*P, HW) VMEM ref of pre-broadcast weight slabs:
               wd_ref[t*C + d][o*P + p, q] =
                   bn_scale[o] * W[o, tap t, (o + d) % C] * valid_t(q)
             (zero-padding validity mask folded in -> no in-kernel masking).
    Per tap: one lane roll (XLU).  Per (tap, diagonal): one sublane roll (XLU)
    + one vld + one mul + one add (VPU) on full (C*P, HW) slabs -- no
    broadcast_in_dim anywhere in the loop.
    """
    rows, hw = cur.shape
    acc = jnp.zeros((rows, hw), jnp.float32)
    for dy in range(3):
        for dx in range(3):
            t = dy * 3 + dx
            s = (dy - 1) * width + (dx - 1)          # flat source offset
            # shifted[q] = cur[q + s]  (lane rotation); wrapped / out-of-image
            # positions are zeroed by the mask folded into the weight slabs.
            sh = cur if s == 0 else pltpu.roll(cur, shift=(-s) % hw, axis=1)
            for d in range(channels):
                # rot[o*P + p] = sh[((o + d) % C)*P + p]: channel diagonal d;
                # channel-major packing keeps batch elements aligned.
                rot = sh if d == 0 else pltpu.roll(
                    sh, shift=(-(d * pack)) % rows, axis=0)
                acc = acc + wd_ref[t * channels + d] * rot
    return acc


def _residual_block_kernel_diag(x_ref, wd1_ref, fb1_ref, wd2_ref, fb2_ref,
                                out_ref, *, width, channels, pack):
    x = x_ref[...]
    h = _conv3x3_diag(x, wd1_ref, width=width, channels=channels, pack=pack)
    h = jnp.maximum(h + fb1_ref[...], 0.0)
    h = _conv3x3_diag(h, wd2_ref, width=width, channels=channels, pack=pack)
    out_ref[...] = jnp.maximum(h + fb2_ref[...] + x, 0.0)


# --------------------------- kernel: MXU im2col path -------------------------
def _conv3x3_mxu(cur, w_ref, mask_ref, *, width):
    """3x3 'same' conv via im2col (9 XLU rolls) + one MXU matmul.

    cur     : (C, HW) f32
    w_ref   : (Cout, 9*C) BN-scaled weights, column k = t*C + ci
    mask_ref: (9, C, HW) zero-padding validity masks (pre-broadcast sublanes)
    """
    rows, hw = cur.shape
    taps = []
    for dy in range(3):
        for dx in range(3):
            t = dy * 3 + dx
            s = (dy - 1) * width + (dx - 1)
            if s == 0:
                taps.append(cur)                      # centre tap always valid
            else:
                taps.append(pltpu.roll(cur, shift=(-s) % hw, axis=1)
                            * mask_ref[t])
    patches = jnp.concatenate(taps, axis=0)           # (9*C, HW) im2col slab
    return jnp.dot(w_ref[...], patches,
                   preferred_element_type=jnp.float32,
                   precision=jax.lax.Precision.HIGHEST)


def _residual_block_kernel_mxu(mask_ref, x_ref, w1_ref, fb1_ref, w2_ref,
                               fb2_ref, out_ref, *, width):
    x = x_ref[...]
    h = _conv3x3_mxu(x, w1_ref, mask_ref, width=width)
    h = jnp.maximum(h + fb1_ref[...], 0.0)
    h = _conv3x3_mxu(h, w2_ref, mask_ref, width=width)
    out_ref[...] = jnp.maximum(h + fb2_ref[...] + x, 0.0)


# ------------------------------ wrapper helpers ------------------------------
def _fold_bn(gamma, beta, mean, var, eps=1e-5):
    scale = gamma / jnp.sqrt(var + eps)
    bias = beta - mean * scale
    return scale, bias                                 # each (C,)


def _coord_maps(H, W):
    # Matches torch AddCoords (with_r=False).  H==1/W==1 -> inf, same as torch.
    xx = (jnp.arange(H, dtype=jnp.float32) / (H - 1)) * 2.0 - 1.0   # varies on H
    yy = (jnp.arange(W, dtype=jnp.float32) / (W - 1)) * 2.0 - 1.0   # varies on W
    xx = jnp.broadcast_to(xx[:, None], (H, W))
    yy = jnp.broadcast_to(yy[None, :], (H, W))
    return jnp.stack([xx, yy], axis=0)                 # (2, H, W)


def _coord_bias(coords_chw, w_coord_hwio):
    """conv3x3(coords) with the coord-channel weight slice -> (Cout, H*W)."""
    cout = w_coord_hwio.shape[-1]
    w_oihw = jnp.transpose(w_coord_hwio, (3, 2, 0, 1))   # (Cout, 2, 3, 3)
    out = jax.lax.conv_general_dilated(
        coords_chw[None], w_oihw, window_strides=(1, 1),
        padding=[(1, 1), (1, 1)],
        dimension_numbers=("NCHW", "OIHW", "NCHW"),
        precision=jax.lax.Precision.HIGHEST)
    return out[0].reshape(cout, -1)


def _tap_masks(H, W):
    """(9, H*W) {0,1} masks: tap (dy,dx) valid where source (y+dy-1, x+dx-1)
    lies inside the image (also kills the flat-roll row/column wrap)."""
    y = np.arange(H)[:, None]
    x = np.arange(W)[None, :]
    rows = []
    for dy in range(3):
        for dx in range(3):
            valid = ((y + dy - 1 >= 0) & (y + dy - 1 < H) &
                     (x + dx - 1 >= 0) & (x + dx - 1 < W))
            rows.append(valid.reshape(-1))
    return jnp.asarray(np.stack(rows, 0).astype(np.float32))


def _spatial_weight_mat(w_hwio, n_in, scale):
    """(3,3,Cin+2,Cout) -> (Cout, 9*n_in) with BN scale folded in (MXU path)."""
    cout = w_hwio.shape[-1]
    w = w_hwio[:, :, :n_in, :]                          # spatial channels only
    w = jnp.transpose(w, (3, 0, 1, 2)).reshape(cout, 9 * n_in)
    return w * scale[:, None]


def _diag_weight_slabs(w_hwio, channels, pack, scale, masks):
    """(3,3,C+2,C) -> (9*C, C*pack, HW) channel-diagonal weight slabs with the
    BN scale, batch-pack replication, lane broadcast AND per-tap validity
    masks all folded in, so the kernel's inner step has zero broadcasts."""
    C = channels
    cout = w_hwio.shape[-1]
    hw = masks.shape[-1]
    w_sp = jnp.transpose(w_hwio[:, :, :C, :], (3, 0, 1, 2)).reshape(cout, 9, C)
    w_sp = w_sp * scale[:, None, None]                  # (Cout, 9, C)
    o = jnp.arange(cout)
    # diagonal d: output channel o pairs with input channel (o + d) % C
    wd = jnp.stack([w_sp[o, :, (o + d) % C] for d in range(C)], axis=0)
    wd = jnp.transpose(wd, (2, 0, 1))                   # (9, C_diag, Cout)
    wd = jnp.repeat(wd, pack, axis=2)                   # (9, C_diag, Cout*pack)
    wdm = wd[:, :, :, None] * masks[:, None, None, :]   # (9, C_diag, rows, HW)
    return wdm.reshape(9 * C, cout * pack, hw)


def _pick_pack(batch, channels, max_pack):
    """# of batch elems interleaved per grid step so a slab fills 8 sublanes."""
    pack = max(1, min(max_pack, 8 // channels))
    while pack > 1 and batch % pack:
        pack -= 1
    return pack


# --------------------------------- wrapper -----------------------------------
@functools.partial(jax.jit, static_argnames=("max_pack",))
def residual_block(x_nchw, w1, bn1, w2, bn2, *, max_pack=8):
    """x_nchw: (B, C, H, W) f32.  w1/w2: HWIO (3,3,C+2,C).  bn*: (g, b, m, v).

    max_pack caps how many batch elements are packed per grid step (pass 1 on
    v7x if you need >= 2 grid steps with a tiny batch -- see module docstring).
    """
    B, C, H, W = x_nchw.shape
    Cout = w1.shape[-1]
    assert C == Cout, "residual add requires in_channels == out_channels"
    HW = H * W

    x = x_nchw.reshape(B, C, HW).astype(jnp.float32)    # free reshape (no transpose)

    coords = _coord_maps(H, W)
    s1, b1 = _fold_bn(*bn1)
    s2, b2 = _fold_bn(*bn2)

    # Coord-channel conv contribution folded with the BN affine -> bias maps.
    fb1 = _coord_bias(coords, w1[:, :, C:, :]) * s1[:, None] + b1[:, None]
    fb2 = _coord_bias(coords, w2[:, :, C:, :]) * s2[:, None] + b2[:, None]

    masks = _tap_masks(H, W)                            # (9, HW)

    if C >= _MXU_MIN_CHANNELS:
        # -------- im2col + MXU path (channels alone fill the sublanes) -------
        pack, rows, nb = 1, C, B
        xp = x
        maskk = jnp.broadcast_to(masks[:, None, :], (9, rows, HW))
        w1k = _spatial_weight_mat(w1, C, s1)            # (Cout, 9*C)
        w2k = _spatial_weight_mat(w2, C, s2)
        operands = (maskk, xp, w1k, fb1, w2k, fb2)
        in_specs = [
            pl.BlockSpec((9, rows, HW), lambda b: (0, 0, 0)),
            pl.BlockSpec((None, rows, HW), lambda b: (b, 0, 0)),
            pl.BlockSpec((Cout, 9 * C), lambda b: (0, 0)),
            pl.BlockSpec((rows, HW), lambda b: (0, 0)),
            pl.BlockSpec((Cout, 9 * C), lambda b: (0, 0)),
            pl.BlockSpec((rows, HW), lambda b: (0, 0)),
        ]
        kernel = functools.partial(_residual_block_kernel_mxu, width=W)
    else:
        # -------- VPU channel-diagonal path, batch packed into sublanes ------
        pack = _pick_pack(B, C, max_pack)
        rows, nb = C * pack, B // pack
        # channel-major / batch-minor interleave: row [c*pack + p]
        xp = (x.reshape(nb, pack, C, HW).transpose(0, 2, 1, 3)
               .reshape(nb, rows, HW))
        wd1 = _diag_weight_slabs(w1, C, pack, s1, masks)   # (9*C, rows, HW)
        wd2 = _diag_weight_slabs(w2, C, pack, s2, masks)
        fb1p = jnp.repeat(fb1, pack, axis=0)               # (rows, HW)
        fb2p = jnp.repeat(fb2, pack, axis=0)
        operands = (xp, wd1, fb1p, wd2, fb2p)
        in_specs = [
            pl.BlockSpec((None, rows, HW), lambda b: (b, 0, 0)),
            pl.BlockSpec((9 * C, rows, HW), lambda b: (0, 0, 0)),
            pl.BlockSpec((rows, HW), lambda b: (0, 0)),
            pl.BlockSpec((9 * C, rows, HW), lambda b: (0, 0, 0)),
            pl.BlockSpec((rows, HW), lambda b: (0, 0)),
        ]
        kernel = functools.partial(_residual_block_kernel_diag,
                                   width=W, channels=C, pack=pack)

    # Grid-invariant operands keep constant index_maps (DMA'd once); at this
    # footprint (<1.5 MiB resident) Buffered(1) / vmem_limit overrides are
    # unnecessary, so they were dropped.
    out = pl.pallas_call(
        kernel,
        out_shape=jax.ShapeDtypeStruct((nb, rows, HW), jnp.float32),
        grid_spec=pltpu.PrefetchScalarGridSpec(
            num_scalar_prefetch=0,
            grid=(nb,),
            in_specs=in_specs,
            out_specs=pl.BlockSpec((None, rows, HW), lambda b: (b, 0, 0)),
        ),
        compiler_params=pltpu.CompilerParams(
            dimension_semantics=("parallel",)),
    )(*operands)

    if pack > 1:
        out = out.reshape(nb, C, pack, HW).transpose(0, 2, 1, 3)
    return out.reshape(B, C, H, W)                      # free reshape to NCHW


# ----------------------------- pure-JAX reference ----------------------------
def _ref_residual_block(x_nchw, w1, bn1, w2, bn2):
    B, C, H, W = x_nchw.shape

    def add_coords(inp):
        xx = (jnp.arange(H, dtype=jnp.float32) / (H - 1) * 2 - 1)[None, None, :, None]
        yy = (jnp.arange(W, dtype=jnp.float32) / (W - 1) * 2 - 1)[None, None, None, :]
        xx = jnp.broadcast_to(xx, (B, 1, H, W))
        yy = jnp.broadcast_to(yy, (B, 1, H, W))
        return jnp.concatenate([inp, xx, yy], axis=1)

    def conv3x3(inp, w_hwio):
        w_oihw = jnp.transpose(w_hwio, (3, 2, 0, 1))
        return jax.lax.conv_general_dilated(
            inp, w_oihw, window_strides=(1, 1), padding=[(1, 1), (1, 1)],
            dimension_numbers=("NCHW", "OIHW", "NCHW"),
            precision=jax.lax.Precision.HIGHEST)

    def bn(inp, params, eps=1e-5):
        g, b, m, v = params
        sc = (g / jnp.sqrt(v + eps))[None, :, None, None]
        bi = (b - m * g / jnp.sqrt(v + eps))[None, :, None, None]
        return inp * sc + bi

    h = jnp.maximum(bn(conv3x3(add_coords(x_nchw), w1), bn1), 0.0)
    h = bn(conv3x3(add_coords(h), w2), bn2)
    return jnp.maximum(h + x_nchw, 0.0)


# ----------------------------------- test ------------------------------------
def _run_case(key, B, C, H, W, label):
    ks = jax.random.split(key, 11)
    x = jax.random.normal(ks[0], (B, C, H, W), jnp.float32)
    # Conv weights (HWIO): CoordConv sees C+2 input channels.
    w1 = 0.1 * jax.random.normal(ks[1], (3, 3, C + 2, C), jnp.float32)
    w2 = 0.1 * jax.random.normal(ks[2], (3, 3, C + 2, C), jnp.float32)
    # BatchNorm params (inference): gamma, beta, running_mean, running_var
    bn1 = (1.0 + 0.1 * jax.random.normal(ks[3], (C,), jnp.float32),
           0.1 * jax.random.normal(ks[4], (C,), jnp.float32),
           0.1 * jax.random.normal(ks[5], (C,), jnp.float32),
           1.0 + 0.1 * jax.random.uniform(ks[6], (C,), jnp.float32))
    bn2 = (1.0 + 0.1 * jax.random.normal(ks[7], (C,), jnp.float32),
           0.1 * jax.random.normal(ks[8], (C,), jnp.float32),
           0.1 * jax.random.normal(ks[9], (C,), jnp.float32),
           1.0 + 0.1 * jax.random.uniform(ks[10], (C,), jnp.float32))

    out = jax.block_until_ready(residual_block(x, w1, bn1, w2, bn2))
    ref = jax.block_until_ready(_ref_residual_block(x, w1, bn1, w2, bn2))
    np.testing.assert_allclose(np.asarray(out), np.asarray(ref),
                               rtol=1e-3, atol=1e-3, err_msg=label)


if __name__ == "__main__":
    root = jax.random.PRNGKey(0)
    k1, k2 = jax.random.split(root)
    # VPU channel-diagonal path: C=4 -> 2 batch elems packed per grid step,
    # grid of 2 steps (keeps both v7x TensorCores busy).
    _run_case(k1, B=4, C=4, H=16, W=16, label="vpu-diag path")
    # im2col + single-jnp.dot MXU path for larger channel counts.
    _run_case(k2, B=2, C=16, H=16, W=16, label="mxu-im2col path")
    print("KERNEL_OK")
</pallas_src>

<mosaic_0001>
module attributes {stable_mosaic.version = 11 : i64} {
  func.func @_residual_block_kernel_diag(%arg0: i32, %arg1: memref<1x8x256xf32, #tpu.memory_space<vmem>>, %arg2: memref<36x8x256xf32, #tpu.memory_space<vmem>>, %arg3: memref<8x256xf32, #tpu.memory_space<vmem>>, %arg4: memref<36x8x256xf32, #tpu.memory_space<vmem>>, %arg5: memref<8x256xf32, #tpu.memory_space<vmem>>, %arg6: memref<1x8x256xf32, #tpu.memory_space<vmem>>) attributes {dimension_semantics = [#tpu.dimension_semantics<parallel>], iteration_bounds = array<i64: 2>, scalar_prefetch = 0 : i64, scratch_operands = 0 : i64, tpu.core_type = #tpu.core_type<tc>, window_params = [{transform_indices = @transform_0, window_bounds = array<i64: 1, 8, 256>}, {pipeline_mode = #tpu.pipeline_mode<synchronous>, transform_indices = @transform_1, window_bounds = array<i64: 36, 8, 256>}, {pipeline_mode = #tpu.pipeline_mode<synchronous>, transform_indices = @transform_2, window_bounds = array<i64: 8, 256>}, {pipeline_mode = #tpu.pipeline_mode<synchronous>, transform_indices = @transform_3, window_bounds = array<i64: 36, 8, 256>}, {pipeline_mode = #tpu.pipeline_mode<synchronous>, transform_indices = @transform_4, window_bounds = array<i64: 8, 256>}, {transform_indices = @transform_5, window_bounds = array<i64: 1, 8, 256>}]} {
    %c0 = arith.constant 0 : index
    %c0_0 = arith.constant 0 : index
    %c0_1 = arith.constant 0 : index
    %0 = vector.load %arg1[%c0, %c0_0, %c0_1] : memref<1x8x256xf32, #tpu.memory_space<vmem>>, vector<1x8x256xf32>
    %1 = vector.shape_cast %0 : vector<1x8x256xf32> to vector<8x256xf32>
    %cst = arith.constant 0.000000e+00 : f32
    %2 = vector.broadcast %cst : f32 to vector<8x256xf32>
    %c17_i32 = arith.constant 17 : i32
    %3 = tpu.dynamic_rotate %1 by %c17_i32 dim 1 : vector<8x256xf32>, i32 -> vector<8x256xf32>
    %c0_2 = arith.constant 0 : index
    %c0_3 = arith.constant 0 : index
    %c0_4 = arith.constant 0 : index
    %4 = vector.load %arg2[%c0_2, %c0_3, %c0_4] : memref<36x8x256xf32, #tpu.memory_space<vmem>>, vector<1x8x256xf32>
    %5 = vector.shape_cast %4 : vector<1x8x256xf32> to vector<8x256xf32>
    %6 = arith.mulf %5, %3 : vector<8x256xf32>
    %7 = arith.addf %2, %6 : vector<8x256xf32>
    %c6_i32 = arith.constant 6 : i32
    %8 = tpu.dynamic_rotate %3 by %c6_i32 dim 0 : vector<8x256xf32>, i32 -> vector<8x256xf32>
    %c1 = arith.constant 1 : index
    %c0_5 = arith.constant 0 : index
    %c0_6 = arith.constant 0 : index
    %9 = vector.load %arg2[%c1, %c0_5, %c0_6] : memref<36x8x256xf32, #tpu.memory_space<vmem>>, vector<1x8x256xf32>
    %10 = vector.shape_cast %9 : vector<1x8x256xf32> to vector<8x256xf32>
    %11 = arith.mulf %10, %8 : vector<8x256xf32>
    %12 = arith.addf %7, %11 : vector<8x256xf32>
    %c4_i32 = arith.constant 4 : i32
    %13 = tpu.dynamic_rotate %3 by %c4_i32 dim 0 : vector<8x256xf32>, i32 -> vector<8x256xf32>
    %c2 = arith.constant 2 : index
    %c0_7 = arith.constant 0 : index
    %c0_8 = arith.constant 0 : index
    %14 = vector.load %arg2[%c2, %c0_7, %c0_8] : memref<36x8x256xf32, #tpu.memory_space<vmem>>, vector<1x8x256xf32>
    %15 = vector.shape_cast %14 : vector<1x8x256xf32> to vector<8x256xf32>
    %16 = arith.mulf %15, %13 : vector<8x256xf32>
    %17 = arith.addf %12, %16 : vector<8x256xf32>
    %c2_i32 = arith.constant 2 : i32
    %18 = tpu.dynamic_rotate %3 by %c2_i32 dim 0 : vector<8x256xf32>, i32 -> vector<8x256xf32>
    %c3 = arith.constant 3 : index
    %c0_9 = arith.constant 0 : index
    %c0_10 = arith.constant 0 : index
    %19 = vector.load %arg2[%c3, %c0_9, %c0_10] : memref<36x8x256xf32, #tpu.memory_space<vmem>>, vector<1x8x256xf32>
    %20 = vector.shape_cast %19 : vector<1x8x256xf32> to vector<8x256xf32>
    %21 = arith.mulf %20, %18 : vector<8x256xf32>
    %22 = arith.addf %17, %21 : vector<8x256xf32>
    %c16_i32 = arith.constant 16 : i32
    %23 = tpu.dynamic_rotate %1 by %c16_i32 dim 1 : vector<8x256xf32>, i32 -> vector<8x256xf32>
    %c4 = arith.constant 4 : index
    %c0_11 = arith.constant 0 : index
    %c0_12 = arith.constant 0 : index
    %24 = vector.load %arg2[%c4, %c0_11, %c0_12] : memref<36x8x256xf32, #tpu.memory_space<vmem>>, vector<1x8x256xf32>
    %25 = vector.shape_cast %24 : vector<1x8x256xf32> to vector<8x256xf32>
    %26 = arith.mulf %25, %23 : vector<8x256xf32>
    %27 = arith.addf %22, %26 : vector<8x256xf32>
    %c6_i32_13 = arith.constant 6 : i32
    %28 = tpu.dynamic_rotate %23 by %c6_i32_13 dim 0 : vector<8x256xf32>, i32 -> vector<8x256xf32>
    %c5 = arith.constant 5 : index
    %c0_14 = arith.constant 0 : index
    %c0_15 = arith.constant 0 : index
    %29 = vector.load %arg2[%c5, %c0_14, %c0_15] : memref<36x8x256xf32, #tpu.memory_space<vmem>>, vector<1x8x256xf32>
    %30 = vector.shape_cast %29 : vector<1x8x256xf32> to vector<8x256xf32>
    %31 = arith.mulf %30, %28 : vector<8x256xf32>
    %32 = arith.addf %27, %31 : vector<8x256xf32>
    %c4_i32_16 = arith.constant 4 : i32
    %33 = tpu.dynamic_rotate %23 by %c4_i32_16 dim 0 : vector<8x256xf32>, i32 -> vector<8x256xf32>
    %c6 = arith.constant 6 : index
    %c0_17 = arith.constant 0 : index
    %c0_18 = arith.constant 0 : index
    %34 = vector.load %arg2[%c6, %c0_17, %c0_18] : memref<36x8x256xf32, #tpu.memory_space<vmem>>, vector<1x8x256xf32>
    %35 = vector.shape_cast %34 : vector<1x8x256xf32> to vector<8x256xf32>
    %36 = arith.mulf %35, %33 : vector<8x256xf32>
    %37 = arith.addf %32, %36 : vector<8x256xf32>
    %c2_i32_19 = arith.constant 2 : i32
    %38 = tpu.dynamic_rotate %23 by %c2_i32_19 dim 0 : vector<8x256xf32>, i32 -> vector<8x256xf32>
    %c7 = arith.constant 7 : index
    %c0_20 = arith.constant 0 : index
    %c0_21 = arith.constant 0 : index
    %39 = vector.load %arg2[%c7, %c0_20, %c0_21] : memref<36x8x256xf32, #tpu.memory_space<vmem>>, vector<1x8x256xf32>
    %40 = vector.shape_cast %39 : vector<1x8x256xf32> to vector<8x256xf32>
    %41 = arith.mulf %40, %38 : vector<8x256xf32>
    %42 = arith.addf %37, %41 : vector<8x256xf32>
    %c15_i32 = arith.constant 15 : i32
    %43 = tpu.dynamic_rotate %1 by %c15_i32 dim 1 : vector<8x256xf32>, i32 -> vector<8x256xf32>
    %c8 = arith.constant 8 : index
    %c0_22 = arith.constant 0 : index
    %c0_23 = arith.constant 0 : index
    %44 = vector.load %arg2[%c8, %c0_22, %c0_23] : memref<36x8x256xf32, #tpu.memory_space<vmem>>, vector<1x8x256xf32>
    %45 = vector.shape_cast %44 : vector<1x8x256xf32> to vector<8x256xf32>
    %46 = arith.mulf %45, %43 : vector<8x256xf32>
    %47 = arith.addf %42, %46 : vector<8x256xf32>
    %c6_i32_24 = arith.constant 6 : i32
    %48 = tpu.dynamic_rotate %43 by %c6_i32_24 dim 0 : vector<8x256xf32>, i32 -> vector<8x256xf32>
    %c9 = arith.constant 9 : index
    %c0_25 = arith.constant 0 : index
    %c0_26 = arith.constant 0 : index
    %49 = vector.load %arg2[%c9, %c0_25, %c0_26] : memref<36x8x256xf32, #tpu.memory_space<vmem>>, vector<1x8x256xf32>
    %50 = vector.shape_cast %49 : vector<1x8x256xf32> to vector<8x256xf32>
    %51 = arith.mulf %50, %48 : vector<8x256xf32>
    %52 = arith.addf %47, %51 : vector<8x256xf32>
    %c4_i32_27 = arith.constant 4 : i32
    %53 = tpu.dynamic_rotate %43 by %c4_i32_27 dim 0 : vector<8x256xf32>, i32 -> vector<8x256xf32>
    %c10 = arith.constant 10 : index
    %c0_28 = arith.constant 0 : index
    %c0_29 = arith.constant 0 : index
    %54 = vector.load %arg2[%c10, %c0_28, %c0_29] : memref<36x8x256xf32, #tpu.memory_space<vmem>>, vector<1x8x256xf32>
    %55 = vector.shape_cast %54 : vector<1x8x256xf32> to vector<8x256xf32>
    %56 = arith.mulf %55, %53 : vector<8x256xf32>
    %57 = arith.addf %52, %56 : vector<8x256xf32>
    %c2_i32_30 = arith.constant 2 : i32
    %58 = tpu.dynamic_rotate %43 by %c2_i32_30 dim 0 : vector<8x256xf32>, i32 -> vector<8x256xf32>
    %c11 = arith.constant 11 : index
    %c0_31 = arith.constant 0 : index
    %c0_32 = arith.constant 0 : index
    %59 = vector.load %arg2[%c11, %c0_31, %c0_32] : memref<36x8x256xf32, #tpu.memory_space<vmem>>, vector<1x8x256xf32>
    %60 = vector.shape_cast %59 : vector<1x8x256xf32> to vector<8x256xf32>
    %61 = arith.mulf %60, %58 : vector<8x256xf32>
    %62 = arith.addf %57, %61 : vector<8x256xf32>
    %c1_i32 = arith.constant 1 : i32
    %63 = tpu.dynamic_rotate %1 by %c1_i32 dim 1 : vector<8x256xf32>, i32 -> vector<8x256xf32>
    %c12 = arith.constant 12 : index
    %c0_33 = arith.constant 0 : index
    %c0_34 = arith.constant 0 : index
    %64 = vector.load %arg2[%c12, %c0_33, %c0_34] : memref<36x8x256xf32, #tpu.memory_space<vmem>>, vector<1x8x256xf32>
    %65 = vector.shape_cast %64 : vector<1x8x256xf32> to vector<8x256xf32>
    %66 = arith.mulf %65, %63 : vector<8x256xf32>
    %67 = arith.addf %62, %66 : vector<8x256xf32>
    %c6_i32_35 = arith.constant 6 : i32
    %68 = tpu.dynamic_rotate %63 by %c6_i32_35 dim 0 : vector<8x256xf32>, i32 -> vector<8x256xf32>
    %c13 = arith.constant 13 : index
    %c0_36 = arith.constant 0 : index
    %c0_37 = arith.constant 0 : index
    %69 = vector.load %arg2[%c13, %c0_36, %c0_37] : memref<36x8x256xf32, #tpu.memory_space<vmem>>, vector<1x8x256xf32>
    %70 = vector.shape_cast %69 : vector<1x8x256xf32> to vector<8x256xf32>
    %71 = arith.mulf %70, %68 : vector<8x256xf32>
    %72 = arith.addf %67, %71 : vector<8x256xf32>
    %c4_i32_38 = arith.constant 4 : i32
    %73 = tpu.dynamic_rotate %63 by %c4_i32_38 dim 0 : vector<8x256xf32>, i32 -> vector<8x256xf32>
    %c14 = arith.constant 14 : index
    %c0_39 = arith.constant 0 : index
    %c0_40 = arith.constant 0 : index
    %74 = vector.load %arg2[%c14, %c0_39, %c0_40] : memref<36x8x256xf32, #tpu.memory_space<vmem>>, vector<1x8x256xf32>
    %75 = vector.shape_cast %74 : vector<1x8x256xf32> to vector<8x256xf32>
    %76 = arith.mulf %75, %73 : vector<8x256xf32>
    %77 = arith.addf %72, %76 : vector<8x256xf32>
    %c2_i32_41 = arith.constant 2 : i32
    %78 = tpu.dynamic_rotate %63 by %c2_i32_41 dim 0 : vector<8x256xf32>, i32 -> vector<8x256xf32>
    %c15 = arith.constant 15 : index
    %c0_42 = arith.constant 0 : index
    %c0_43 = arith.constant 0 : index
    %79 = vector.load %arg2[%c15, %c0_42, %c0_43] : memref<36x8x256xf32, #tpu.memory_space<vmem>>, vector<1x8x256xf32>
    %80 = vector.shape_cast %79 : vector<1x8x256xf32> to vector<8x256xf32>
    %81 = arith.mulf %80, %78 : vector<8x256xf32>
    %82 = arith.addf %77, %81 : vector<8x256xf32>
    %c16 = arith.constant 16 : index
    %c0_44 = arith.constant 0 : index
    %c0_45 = arith.constant 0 : index
    %83 = vector.load %arg2[%c16, %c0_44, %c0_45] : memref<36x8x256xf32, #tpu.memory_space<vmem>>, vector<1x8x256xf32>
    %84 = vector.shape_cast %83 : vector<1x8x256xf32> to vector<8x256xf32>
    %85 = arith.mulf %84, %1 : vector<8x256xf32>
    %86 = arith.addf %82, %85 : vector<8x256xf32>
    %c6_i32_46 = arith.constant 6 : i32
    %87 = tpu.dynamic_rotate %1 by %c6_i32_46 dim 0 : vector<8x256xf32>, i32 -> vector<8x256xf32>
    %c17 = arith.constant 17 : index
    %c0_47 = arith.constant 0 : index
    %c0_48 = arith.constant 0 : index
    %88 = vector.load %arg2[%c17, %c0_47, %c0_48] : memref<36x8x256xf32, #tpu.memory_space<vmem>>, vector<1x8x256xf32>
    %89 = vector.shape_cast %88 : vector<1x8x256xf32> to vector<8x256xf32>
    %90 = arith.mulf %89, %87 : vector<8x256xf32>
    %91 = arith.addf %86, %90 : vector<8x256xf32>
    %c4_i32_49 = arith.constant 4 : i32
    %92 = tpu.dynamic_rotate %1 by %c4_i32_49 dim 0 : vector<8x256xf32>, i32 -> vector<8x256xf32>
    %c18 = arith.constant 18 : index
    %c0_50 = arith.constant 0 : index
    %c0_51 = arith.constant 0 : index
    %93 = vector.load %arg2[%c18, %c0_50, %c0_51] : memref<36x8x256xf32, #tpu.memory_space<vmem>>, vector<1x8x256xf32>
    %94 = vector.shape_cast %93 : vector<1x8x256xf32> to vector<8x256xf32>
    %95 = arith.mulf %94, %92 : vector<8x256xf32>
    %96 = arith.addf %91, %95 : vector<8x256xf32>
    %c2_i32_52 = arith.constant 2 : i32
    %97 = tpu.dynamic_rotate %1 by %c2_i32_52 dim 0 : vector<8x256xf32>, i32 -> vector<8x256xf32>
    %c19 = arith.constant 19 : index
    %c0_53 = arith.constant 0 : index
    %c0_54 = arith.constant 0 : index
    %98 = vector.load %arg2[%c19, %c0_53, %c0_54] : memref<36x8x256xf32, #tpu.memory_space<vmem>>, vector<1x8x256xf32>
    %99 = vector.shape_cast %98 : vector<1x8x256xf32> to vector<8x256xf32>
    %100 = arith.mulf %99, %97 : vector<8x256xf32>
    %101 = arith.addf %96, %100 : vector<8x256xf32>
    %c255_i32 = arith.constant 255 : i32
    %102 = tpu.dynamic_rotate %1 by %c255_i32 dim 1 : vector<8x256xf32>, i32 -> vector<8x256xf32>
    %c20 = arith.constant 20 : index
    %c0_55 = arith.constant 0 : index
    %c0_56 = arith.constant 0 : index
    %103 = vector.load %arg2[%c20, %c0_55, %c0_56] : memref<36x8x256xf32, #tpu.memory_space<vmem>>, vector<1x8x256xf32>
    %104 = vector.shape_cast %103 : vector<1x8x256xf32> to vector<8x256xf32>
    %105 = arith.mulf %104, %102 : vector<8x256xf32>
    %106 = arith.addf %101, %105 : vector<8x256xf32>
    %c6_i32_57 = arith.constant 6 : i32
    %107 = tpu.dynamic_rotate %102 by %c6_i32_57 dim 0 : vector<8x256xf32>, i32 -> vector<8x256xf32>
    %c21 = arith.constant 21 : index
    %c0_58 = arith.constant 0 : index
    %c0_59 = arith.constant 0 : index
    %108 = vector.load %arg2[%c21, %c0_58, %c0_59] : memref<36x8x256xf32, #tpu.memory_space<vmem>>, vector<1x8x256xf32>
    %109 = vector.shape_cast %108 : vector<1x8x256xf32> to vector<8x256xf32>
    %110 = arith.mulf %109, %107 : vector<8x256xf32>
    %111 = arith.addf %106, %110 : vector<8x256xf32>
    %c4_i32_60 = arith.constant 4 : i32
    %112 = tpu.dynamic_rotate %102 by %c4_i32_60 dim 0 : vector<8x256xf32>, i32 -> vector<8x256xf32>
    %c22 = arith.constant 22 : index
    %c0_61 = arith.constant 0 : index
    %c0_62 = arith.constant 0 : index
    %113 = vector.load %arg2[%c22, %c0_61, %c0_62] : memref<36x8x256xf32, #tpu.memory_space<vmem>>, vector<1x8x256xf32>
    %114 = vector.shape_cast %113 : vector<1x8x256xf32> to vector<8x256xf32>
    %115 = arith.mulf %114, %112 : vector<8x256xf32>
    %116 = arith.addf %111, %115 : vector<8x256xf32>
    %c2_i32_63 = arith.constant 2 : i32
    %117 = tpu.dynamic_rotate %102 by %c2_i32_63 dim 0 : vector<8x256xf32>, i32 -> vector<8x256xf32>
    %c23 = arith.constant 23 : index
    %c0_64 = arith.constant 0 : index
    %c0_65 = arith.constant 0 : index
    %118 = vector.load %arg2[%c23, %c0_64, %c0_65] : memref<36x8x256xf32, #tpu.memory_space<vmem>>, vector<1x8x256xf32>
    %119 = vector.shape_cast %118 : vector<1x8x256xf32> to vector<8x256xf32>
    %120 = arith.mulf %119, %117 : vector<8x256xf32>
    %121 = arith.addf %116, %120 : vector<8x256xf32>
    %c241_i32 = arith.constant 241 : i32
    %122 = tpu.dynamic_rotate %1 by %c241_i32 dim 1 : vector<8x256xf32>, i32 -> vector<8x256xf32>
    %c24 = arith.constant 24 : index
    %c0_66 = arith.constant 0 : index
    %c0_67 = arith.constant 0 : index
    %123 = vector.load %arg2[%c24, %c0_66, %c0_67] : memref<36x8x256xf32, #tpu.memory_space<vmem>>, vector<1x8x256xf32>
    %124 = vector.shape_cast %123 : vector<1x8x256xf32> to vector<8x256xf32>
    %125 = arith.mulf %124, %122 : vector<8x256xf32>
    %126 = arith.addf %121, %125 : vector<8x256xf32>
    %c6_i32_68 = arith.constant 6 : i32
    %127 = tpu.dynamic_rotate %122 by %c6_i32_68 dim 0 : vector<8x256xf32>, i32 -> vector<8x256xf32>
    %c25 = arith.constant 25 : index
    %c0_69 = arith.constant 0 : index
    %c0_70 = arith.constant 0 : index
    %128 = vector.load %arg2[%c25, %c0_69, %c0_70] : memref<36x8x256xf32, #tpu.memory_space<vmem>>, vector<1x8x256xf32>
    %129 = vector.shape_cast %128 : vector<1x8x256xf32> to vector<8x256xf32>
    %130 = arith.mulf %129, %127 : vector<8x256xf32>
    %131 = arith.addf %126, %130 : vector<8x256xf32>
    %c4_i32_71 = arith.constant 4 : i32
    %132 = tpu.dynamic_rotate %122 by %c4_i32_71 dim 0 : vector<8x256xf32>, i32 -> vector<8x256xf32>
    %c26 = arith.constant 26 : index
    %c0_72 = arith.constant 0 : index
    %c0_73 = arith.constant 0 : index
    %133 = vector.load %arg2[%c26, %c0_72, %c0_73] : memref<36x8x256xf32, #tpu.memory_space<vmem>>, vector<1x8x256xf32>
    %134 = vector.shape_cast %133 : vector<1x8x256xf32> to vector<8x256xf32>
    %135 = arith.mulf %134, %132 : vector<8x256xf32>
    %136 = arith.addf %131, %135 : vector<8x256xf32>
    %c2_i32_74 = arith.constant 2 : i32
    %137 = tpu.dynamic_rotate %122 by %c2_i32_74 dim 0 : vector<8x256xf32>, i32 -> vector<8x256xf32>
    %c27 = arith.constant 27 : index
    %c0_75 = arith.constant 0 : index
    %c0_76 = arith.constant 0 : index
    %138 = vector.load %arg2[%c27, %c0_75, %c0_76] : memref<36x8x256xf32, #tpu.memory_space<vmem>>, vector<1x8x256xf32>
    %139 = vector.shape_cast %138 : vector<1x8x256xf32> to vector<8x256xf32>
    %140 = arith.mulf %139, %137 : vector<8x256xf32>
    %141 = arith.addf %136, %140 : vector<8x256xf32>
    %c240_i32 = arith.constant 240 : i32
    %142 = tpu.dynamic_rotate %1 by %c240_i32 dim 1 : vector<8x256xf32>, i32 -> vector<8x256xf32>
    %c28 = arith.constant 28 : index
    %c0_77 = arith.constant 0 : index
    %c0_78 = arith.constant 0 : index
    %143 = vector.load %arg2[%c28, %c0_77, %c0_78] : memref<36x8x256xf32, #tpu.memory_space<vmem>>, vector<1x8x256xf32>
    %144 = vector.shape_cast %143 : vector<1x8x256xf32> to vector<8x256xf32>
    %145 = arith.mulf %144, %142 : vector<8x256xf32>
    %146 = arith.addf %141, %145 : vector<8x256xf32>
    %c6_i32_79 = arith.constant 6 : i32
    %147 = tpu.dynamic_rotate %142 by %c6_i32_79 dim 0 : vector<8x256xf32>, i32 -> vector<8x256xf32>
    %c29 = arith.constant 29 : index
    %c0_80 = arith.constant 0 : index
    %c0_81 = arith.constant 0 : index
    %148 = vector.load %arg2[%c29, %c0_80, %c0_81] : memref<36x8x256xf32, #tpu.memory_space<vmem>>, vector<1x8x256xf32>
    %149 = vector.shape_cast %148 : vector<1x8x256xf32> to vector<8x256xf32>
    %150 = arith.mulf %149, %147 : vector<8x256xf32>
    %151 = arith.addf %146, %150 : vector<8x256xf32>
    %c4_i32_82 = arith.constant 4 : i32
    %152 = tpu.dynamic_rotate %142 by %c4_i32_82 dim 0 : vector<8x256xf32>, i32 -> vector<8x256xf32>
    %c30 = arith.constant 30 : index
    %c0_83 = arith.constant 0 : index
    %c0_84 = arith.constant 0 : index
    %153 = vector.load %arg2[%c30, %c0_83, %c0_84] : memref<36x8x256xf32, #tpu.memory_space<vmem>>, vector<1x8x256xf32>
    %154 = vector.shape_cast %153 : vector<1x8x256xf32> to vector<8x256xf32>
    %155 = arith.mulf %154, %152 : vector<8x256xf32>
    %156 = arith.addf %151, %155 : vector<8x256xf32>
    %c2_i32_85 = arith.constant 2 : i32
    %157 = tpu.dynamic_rotate %142 by %c2_i32_85 dim 0 : vector<8x256xf32>, i32 -> vector<8x256xf32>
    %c31 = arith.constant 31 : index
    %c0_86 = arith.constant 0 : index
    %c0_87 = arith.constant 0 : index
    %158 = vector.load %arg2[%c31, %c0_86, %c0_87] : memref<36x8x256xf32, #tpu.memory_space<vmem>>, vector<1x8x256xf32>
    %159 = vector.shape_cast %158 : vector<1x8x256xf32> to vector<8x256xf32>
    %160 = arith.mulf %159, %157 : vector<8x256xf32>
    %161 = arith.addf %156, %160 : vector<8x256xf32>
    %c239_i32 = arith.constant 239 : i32
    %162 = tpu.dynamic_rotate %1 by %c239_i32 dim 1 : vector<8x256xf32>, i32 -> vector<8x256xf32>
    %c32 = arith.constant 32 : index
    %c0_88 = arith.constant 0 : index
    %c0_89 = arith.constant 0 : index
    %163 = vector.load %arg2[%c32, %c0_88, %c0_89] : memref<36x8x256xf32, #tpu.memory_space<vmem>>, vector<1x8x256xf32>
    %164 = vector.shape_cast %163 : vector<1x8x256xf32> to vector<8x256xf32>
    %165 = arith.mulf %164, %162 : vector<8x256xf32>
    %166 = arith.addf %161, %165 : vector<8x256xf32>
    %c6_i32_90 = arith.constant 6 : i32
    %167 = tpu.dynamic_rotate %162 by %c6_i32_90 dim 0 : vector<8x256xf32>, i32 -> vector<8x256xf32>
    %c33 = arith.constant 33 : index
    %c0_91 = arith.constant 0 : index
    %c0_92 = arith.constant 0 : index
    %168 = vector.load %arg2[%c33, %c0_91, %c0_92] : memref<36x8x256xf32, #tpu.memory_space<vmem>>, vector<1x8x256xf32>
    %169 = vector.shape_cast %168 : vector<1x8x256xf32> to vector<8x256xf32>
    %170 = arith.mulf %169, %167 : vector<8x256xf32>
    %171 = arith.addf %166, %170 : vector<8x256xf32>
    %c4_i32_93 = arith.constant 4 : i32
    %172 = tpu.dynamic_rotate %162 by %c4_i32_93 dim 0 : vector<8x256xf32>, i32 -> vector<8x256xf32>
    %c34 = arith.constant 34 : index
    %c0_94 = arith.constant 0 : index
    %c0_95 = arith.constant 0 : index
    %173 = vector.load %arg2[%c34, %c0_94, %c0_95] : memref<36x8x256xf32, #tpu.memory_space<vmem>>, vector<1x8x256xf32>
    %174 = vector.shape_cast %173 : vector<1x8x256xf32> to vector<8x256xf32>
    %175 = arith.mulf %174, %172 : vector<8x256xf32>
    %176 = arith.addf %171, %175 : vector<8x256xf32>
    %c2_i32_96 = arith.constant 2 : i32
    %177 = tpu.dynamic_rotate %162 by %c2_i32_96 dim 0 : vector<8x256xf32>, i32 -> vector<8x256xf32>
    %c35 = arith.constant 35 : index
    %c0_97 = arith.constant 0 : index
    %c0_98 = arith.constant 0 : index
    %178 = vector.load %arg2[%c35, %c0_97, %c0_98] : memref<36x8x256xf32, #tpu.memory_space<vmem>>, vector<1x8x256xf32>
    %179 = vector.shape_cast %178 : vector<1x8x256xf32> to vector<8x256xf32>
    %180 = arith.mulf %179, %177 : vector<8x256xf32>
    %181 = arith.addf %176, %180 : vector<8x256xf32>
    %c0_99 = arith.constant 0 : index
    %c0_100 = arith.constant 0 : index
    %182 = vector.load %arg3[%c0_99, %c0_100] : memref<8x256xf32, #tpu.memory_space<vmem>>, vector<8x256xf32>
    %183 = arith.addf %181, %182 : vector<8x256xf32>
    %cst_101 = arith.constant 0.000000e+00 : f32
    %184 = vector.broadcast %cst_101 : f32 to vector<8x256xf32>
    %185 = arith.maximumf %183, %184 : vector<8x256xf32>
    %cst_102 = arith.constant 0.000000e+00 : f32
    %186 = vector.broadcast %cst_102 : f32 to vector<8x256xf32>
    %c17_i32_103 = arith.constant 17 : i32
    %187 = tpu.dynamic_rotate %185 by %c17_i32_103 dim 1 : vector<8x256xf32>, i32 -> vector<8x256xf32>
    %c0_104 = arith.constant 0 : index
    %c0_105 = arith.constant 0 : index
    %c0_106 = arith.constant 0 : index
    %188 = vector.load %arg4[%c0_104, %c0_105, %c0_106] : memref<36x8x256xf32, #tpu.memory_space<vmem>>, vector<1x8x256xf32>
    %189 = vector.shape_cast %188 : vector<1x8x256xf32> to vector<8x256xf32>
    %190 = arith.mulf %189, %187 : vector<8x256xf32>
    %191 = arith.addf %186, %190 : vector<8x256xf32>
    %c6_i32_107 = arith.constant 6 : i32
    %192 = tpu.dynamic_rotate %187 by %c6_i32_107 dim 0 : vector<8x256xf32>, i32 -> vector<8x256xf32>
    %c1_108 = arith.constant 1 : index
    %c0_109 = arith.constant 0 : index
    %c0_110 = arith.constant 0 : index
    %193 = vector.load %arg4[%c1_108, %c0_109, %c0_110] : memref<36x8x256xf32, #tpu.memory_space<vmem>>, vector<1x8x256xf32>
    %194 = vector.shape_cast %193 : vector<1x8x256xf32> to vector<8x256xf32>
    %195 = arith.mulf %194, %192 : vector<8x256xf32>
    %196 = arith.addf %191, %195 : vector<8x256xf32>
    %c4_i32_111 = arith.constant 4 : i32
    %197 = tpu.dynamic_rotate %187 by %c4_i32_111 dim 0 : vector<8x256xf32>, i32 -> vector<8x256xf32>
    %c2_112 = arith.constant 2 : index
    %c0_113 = arith.constant 0 : index
    %c0_114 = arith.constant 0 : index
    %198 = vector.load %arg4[%c2_112, %c0_113, %c0_114] : memref<36x8x256xf32, #tpu.memory_space<vmem>>, vector<1x8x256xf32>
    %199 = vector.shape_cast %198 : vector<1x8x256xf32> to vector<8x256xf32>
    %200 = arith.mulf %199, %197 : vector<8x256xf32>
    %201 = arith.addf %196, %200 : vector<8x256xf32>
    %c2_i32_115 = arith.constant 2 : i32
    %202 = tpu.dynamic_rotate %187 by %c2_i32_115 dim 0 : vector<8x256xf32>, i32 -> vector<8x256xf32>
    %c3_116 = arith.constant 3 : index
    %c0_117 = arith.constant 0 : index
    %c0_118 = arith.constant 0 : index
    %203 = vector.load %arg4[%c3_116, %c0_117, %c0_118] : memref<36x8x256xf32, #tpu.memory_space<vmem>>, vector<1x8x256xf32>
    %204 = vector.shape_cast %203 : vector<1x8x256xf32> to vector<8x256xf32>
    %205 = arith.mulf %204, %202 : vector<8x256xf32>
    %206 = arith.addf %201, %205 : vector<8x256xf32>
    %c16_i32_119 = arith.constant 16 : i32
    %207 = tpu.dynamic_rotate %185 by %c16_i32_119 dim 1 : vector<8x256xf32>, i32 -> vector<8x256xf32>
    %c4_120 = arith.constant 4 : index
    %c0_121 = arith.constant 0 : index
    %c0_122 = arith.constant 0 : index
    %208 = vector.load %arg4[%c4_120, %c0_121, %c0_122] : memref<36x8x256xf32, #tpu.memory_space<vmem>>, vector<1x8x256xf32>
    %209 = vector.shape_cast %208 : vector<1x8x256xf32> to vector<8x256xf32>
    %210 = arith.mulf %209, %207 : vector<8x256xf32>
    %211 = arith.addf %206, %210 : vector<8x256xf32>
    %c6_i32_123 = arith.constant 6 : i32
    %212 = tpu.dynamic_rotate %207 by %c6_i32_123 dim 0 : vector<8x256xf32>, i32 -> vector<8x256xf32>
    %c5_124 = arith.constant 5 : index
    %c0_125 = arith.constant 0 : index
    %c0_126 = arith.constant 0 : index
    %213 = vector.load %arg4[%c5_124, %c0_125, %c0_126] : memref<36x8x256xf32, #tpu.memory_space<vmem>>, vector<1x8x256xf32>
    %214 = vector.shape_cast %213 : vector<1x8x256xf32> to vector<8x256xf32>
    %215 = arith.mulf %214, %212 : vector<8x256xf32>
    %216 = arith.addf %211, %215 : vector<8x256xf32>
    %c4_i32_127 = arith.constant 4 : i32
    %217 = tpu.dynamic_rotate %207 by %c4_i32_127 dim 0 : vector<8x256xf32>, i32 -> vector<8x256xf32>
    %c6_128 = arith.constant 6 : index
    %c0_129 = arith.constant 0 : index
    %c0_130 = arith.constant 0 : index
    %218 = vector.load %arg4[%c6_128, %c0_129, %c0_130] : memref<36x8x256xf32, #tpu.memory_space<vmem>>, vector<1x8x256xf32>
    %219 = vector.shape_cast %218 : vector<1x8x256xf32> to vector<8x256xf32>
    %220 = arith.mulf %219, %217 : vector<8x256xf32>
    %221 = arith.addf %216, %220 : vector<8x256xf32>
    %c2_i32_131 = arith.constant 2 : i32
    %222 = tpu.dynamic_rotate %207 by %c2_i32_131 dim 0 : vector<8x256xf32>, i32 -> vector<8x256xf32>
    %c7_132 = arith.constant 7 : index
    %c0_133 = arith.constant 0 : index
    %c0_134 = arith.constant 0 : index
    %223 = vector.load %arg4[%c7_132, %c0_133, %c0_134] : memref<36x8x256xf32, #tpu.memory_space<vmem>>, vector<1x8x256xf32>
    %224 = vector.shape_cast %223 : vector<1x8x256xf32> to vector<8x256xf32>
    %225 = arith.mulf %224, %222 : vector<8x256xf32>
    %226 = arith.addf %221, %225 : vector<8x256xf32>
    %c15_i32_135 = arith.constant 15 : i32
    %227 = tpu.dynamic_rotate %185 by %c15_i32_135 dim 1 : vector<8x256xf32>, i32 -> vector<8x256xf32>
    %c8_136 = arith.constant 8 : index
    %c0_137 = arith.constant 0 : index
    %c0_138 = arith.constant 0 : index
    %228 = vector.load %arg4[%c8_136, %c0_137, %c0_138] : memref<36x8x256xf32, #tpu.memory_space<vmem>>, vector<1x8x256xf32>
    %229 = vector.shape_cast %228 : vector<1x8x256xf32> to vector<8x256xf32>
    %230 = arith.mulf %229, %227 : vector<8x256xf32>
    %231 = arith.addf %226, %230 : vector<8x256xf32>
    %c6_i32_139 = arith.constant 6 : i32
    %232 = tpu.dynamic_rotate %227 by %c6_i32_139 dim 0 : vector<8x256xf32>, i32 -> vector<8x256xf32>
    %c9_140 = arith.constant 9 : index
    %c0_141 = arith.constant 0 : index
    %c0_142 = arith.constant 0 : index
    %233 = vector.load %arg4[%c9_140, %c0_141, %c0_142] : memref<36x8x256xf32, #tpu.memory_space<vmem>>, vector<1x8x256xf32>
    %234 = vector.shape_cast %233 : vector<1x8x256xf32> to vector<8x256xf32>
    %235 = arith.mulf %234, %232 : vector<8x256xf32>
    %236 = arith.addf %231, %235 : vector<8x256xf32>
    %c4_i32_143 = arith.constant 4 : i32
    %237 = tpu.dynamic_rotate %227 by %c4_i32_143 dim 0 : vector<8x256xf32>, i32 -> vector<8x256xf32>
    %c10_144 = arith.constant 10 : index
    %c0_145 = arith.constant 0 : index
    %c0_146 = arith.constant 0 : index
    %238 = vector.load %arg4[%c10_144, %c0_145, %c0_146] : memref<36x8x256xf32, #tpu.memory_space<vmem>>, vector<1x8x256xf32>
    %239 = vector.shape_cast %238 : vector<1x8x256xf32> to vector<8x256xf32>
    %240 = arith.mulf %239, %237 : vector<8x256xf32>
    %241 = arith.addf %236, %240 : vector<8x256xf32>
    %c2_i32_147 = arith.constant 2 : i32
    %242 = tpu.dynamic_rotate %227 by %c2_i32_147 dim 0 : vector<8x256xf32>, i32 -> vector<8x256xf32>
    %c11_148 = arith.constant 11 : index
    %c0_149 = arith.constant 0 : index
    %c0_150 = arith.constant 0 : index
    %243 = vector.load %arg4[%c11_148, %c0_149, %c0_150] : memref<36x8x256xf32, #tpu.memory_space<vmem>>, vector<1x8x256xf32>
    %244 = vector.shape_cast %243 : vector<1x8x256xf32> to vector<8x256xf32>
    %245 = arith.mulf %244, %242 : vector<8x256xf32>
    %246 = arith.addf %241, %245 : vector<8x256xf32>
    %c1_i32_151 = arith.constant 1 : i32
    %247 = tpu.dynamic_rotate %185 by %c1_i32_151 dim 1 : vector<8x256xf32>, i32 -> vector<8x256xf32>
    %c12_152 = arith.constant 12 : index
    %c0_153 = arith.constant 0 : index
    %c0_154 = arith.constant 0 : index
    %248 = vector.load %arg4[%c12_152, %c0_153, %c0_154] : memref<36x8x256xf32, #tpu.memory_space<vmem>>, vector<1x8x256xf32>
    %249 = vector.shape_cast %248 : vector<1x8x256xf32> to vector<8x256xf32>
    %250 = arith.mulf %249, %247 : vector<8x256xf32>
    %251 = arith.addf %246, %250 : vector<8x256xf32>
    %c6_i32_155 = arith.constant 6 : i32
    %252 = tpu.dynamic_rotate %247 by %c6_i32_155 dim 0 : vector<8x256xf32>, i32 -> vector<8x256xf32>
    %c13_156 = arith.constant 13 : index
    %c0_157 = arith.constant 0 : index
    %c0_158 = arith.constant 0 : index
    %253 = vector.load %arg4[%c13_156, %c0_157, %c0_158] : memref<36x8x256xf32, #tpu.memory_space<vmem>>, vector<1x8x256xf32>
    %254 = vector.shape_cast %253 : vector<1x8x256xf32> to vector<8x256xf32>
    %255 = arith.mulf %254, %252 : vector<8x256xf32>
    %256 = arith.addf %251, %255 : vector<8x256xf32>
    %c4_i32_159 = arith.constant 4 : i32
    %257 = tpu.dynamic_rotate %247 by %c4_i32_159 dim 0 : vector<8x256xf32>, i32 -> vector<8x256xf32>
    %c14_160 = arith.constant 14 : index
    %c0_161 = arith.constant 0 : index
    %c0_162 = arith.constant 0 : index
    %258 = vector.load %arg4[%c14_160, %c0_161, %c0_162] : memref<36x8x256xf32, #tpu.memory_space<vmem>>, vector<1x8x256xf32>
    %259 = vector.shape_cast %258 : vector<1x8x256xf32> to vector<8x256xf32>
    %260 = arith.mulf %259, %257 : vector<8x256xf32>
    %261 = arith.addf %256, %260 : vector<8x256xf32>
    %c2_i32_163 = arith.constant 2 : i32
    %262 = tpu.dynamic_rotate %247 by %c2_i32_163 dim 0 : vector<8x256xf32>, i32 -> vector<8x256xf32>
    %c15_164 = arith.constant 15 : index
    %c0_165 = arith.constant 0 : index
    %c0_166 = arith.constant 0 : index
    %263 = vector.load %arg4[%c15_164, %c0_165, %c0_166] : memref<36x8x256xf32, #tpu.memory_space<vmem>>, vector<1x8x256xf32>
    %264 = vector.shape_cast %263 : vector<1x8x256xf32> to vector<8x256xf32>
    %265 = arith.mulf %264, %262 : vector<8x256xf32>
    %266 = arith.addf %261, %265 : vector<8x256xf32>
    %c16_167 = arith.constant 16 : index
    %c0_168 = arith.constant 0 : index
    %c0_169 = arith.constant 0 : index
    %267 = vector.load %arg4[%c16_167, %c0_168, %c0_169] : memref<36x8x256xf32, #tpu.memory_space<vmem>>, vector<1x8x256xf32>
    %268 = vector.shape_cast %267 : vector<1x8x256xf32> to vector<8x256xf32>
    %269 = arith.mulf %268, %185 : vector<8x256xf32>
    %270 = arith.addf %266, %269 : vector<8x256xf32>
    %c6_i32_170 = arith.constant 6 : i32
    %271 = tpu.dynamic_rotate %185 by %c6_i32_170 dim 0 : vector<8x256xf32>, i32 -> vector<8x256xf32>
    %c17_171 = arith.constant 17 : index
    %c0_172 = arith.constant 0 : index
    %c0_173 = arith.constant 0 : index
    %272 = vector.load %arg4[%c17_171, %c0_172, %c0_173] : memref<36x8x256xf32, #tpu.memory_space<vmem>>, vector<1x8x256xf32>
    %273 = vector.shape_cast %272 : vector<1x8x256xf32> to vector<8x256xf32>
    %274 = arith.mulf %273, %271 : vector<8x256xf32>
    %275 = arith.addf %270, %274 : vector<8x256xf32>
    %c4_i32_174 = arith.constant 4 : i32
    %276 = tpu.dynamic_rotate %185 by %c4_i32_174 dim 0 : vector<8x256xf32>, i32 -> vector<8x256xf32>
    %c18_175 = arith.constant 18 : index
    %c0_176 = arith.constant 0 : index
    %c0_177 = arith.constant 0 : index
    %277 = vector.load %arg4[%c18_175, %c0_176, %c0_177] : memref<36x8x256xf32, #tpu.memory_space<vmem>>, vector<1x8x256xf32>
    %278 = vector.shape_cast %277 : vector<1x8x256xf32> to vector<8x256xf32>
    %279 = arith.mulf %278, %276 : vector<8x256xf32>
    %280 = arith.addf %275, %279 : vector<8x256xf32>
    %c2_i32_178 = arith.constant 2 : i32
    %281 = tpu.dynamic_rotate %185 by %c2_i32_178 dim 0 : vector<8x256xf32>, i32 -> vector<8x256xf32>
    %c19_179 = arith.constant 19 : index
    %c0_180 = arith.constant 0 : index
    %c0_181 = arith.constant 0 : index
    %282 = vector.load %arg4[%c19_179, %c0_180, %c0_181] : memref<36x8x256xf32, #tpu.memory_space<vmem>>, vector<1x8x256xf32>
    %283 = vector.shape_cast %282 : vector<1x8x256xf32> to vector<8x256xf32>
    %284 = arith.mulf %283, %281 : vector<8x256xf32>
    %285 = arith.addf %280, %284 : vector<8x256xf32>
    %c255_i32_182 = arith.constant 255 : i32
    %286 = tpu.dynamic_rotate %185 by %c255_i32_182 dim 1 : vector<8x256xf32>, i32 -> vector<8x256xf32>
    %c20_183 = arith.constant 20 : index
    %c0_184 = arith.constant 0 : index
    %c0_185 = arith.constant 0 : index
    %287 = vector.load %arg4[%c20_183, %c0_184, %c0_185] : memref<36x8x256xf32, #tpu.memory_space<vmem>>, vector<1x8x256xf32>
    %288 = vector.shape_cast %287 : vector<1x8x256xf32> to vector<8x256xf32>
    %289 = arith.mulf %288, %286 : vector<8x256xf32>
    %290 = arith.addf %285, %289 : vector<8x256xf32>
    %c6_i32_186 = arith.constant 6 : i32
    %291 = tpu.dynamic_rotate %286 by %c6_i32_186 dim 0 : vector<8x256xf32>, i32 -> vector<8x256xf32>
    %c21_187 = arith.constant 21 : index
    %c0_188 = arith.constant 0 : index
    %c0_189 = arith.constant 0 : index
    %292 = vector.load %arg4[%c21_187, %c0_188, %c0_189] : memref<36x8x256xf32, #tpu.memory_space<vmem>>, vector<1x8x256xf32>
    %293 = vector.shape_cast %292 : vector<1x8x256xf32> to vector<8x256xf32>
    %294 = arith.mulf %293, %291 : vector<8x256xf32>
    %295 = arith.addf %290, %294 : vector<8x256xf32>
    %c4_i32_190 = arith.constant 4 : i32
    %296 = tpu.dynamic_rotate %286 by %c4_i32_190 dim 0 : vector<8x256xf32>, i32 -> vector<8x256xf32>
    %c22_191 = arith.constant 22 : index
    %c0_192 = arith.constant 0 : index
    %c0_193 = arith.constant 0 : index
    %297 = vector.load %arg4[%c22_191, %c0_192, %c0_193] : memref<36x8x256xf32, #tpu.memory_space<vmem>>, vector<1x8x256xf32>
    %298 = vector.shape_cast %297 : vector<1x8x256xf32> to vector<8x256xf32>
    %299 = arith.mulf %298, %296 : vector<8x256xf32>
    %300 = arith.addf %295, %299 : vector<8x256xf32>
    %c2_i32_194 = arith.constant 2 : i32
    %301 = tpu.dynamic_rotate %286 by %c2_i32_194 dim 0 : vector<8x256xf32>, i32 -> vector<8x256xf32>
    %c23_195 = arith.constant 23 : index
    %c0_196 = arith.constant 0 : index
    %c0_197 = arith.constant 0 : index
    %302 = vector.load %arg4[%c23_195, %c0_196, %c0_197] : memref<36x8x256xf32, #tpu.memory_space<vmem>>, vector<1x8x256xf32>
    %303 = vector.shape_cast %302 : vector<1x8x256xf32> to vector<8x256xf32>
    %304 = arith.mulf %303, %301 : vector<8x256xf32>
    %305 = arith.addf %300, %304 : vector<8x256xf32>
    %c241_i32_198 = arith.constant 241 : i32
    %306 = tpu.dynamic_rotate %185 by %c241_i32_198 dim 1 : vector<8x256xf32>, i32 -> vector<8x256xf32>
    %c24_199 = arith.constant 24 : index
    %c0_200 = arith.constant 0 : index
    %c0_201 = arith.constant 0 : index
    %307 = vector.load %arg4[%c24_199, %c0_200, %c0_201] : memref<36x8x256xf32, #tpu.memory_space<vmem>>, vector<1x8x256xf32>
    %308 = vector.shape_cast %307 : vector<1x8x256xf32> to vector<8x256xf32>
    %309 = arith.mulf %308, %306 : vector<8x256xf32>
    %310 = arith.addf %305, %309 : vector<8x256xf32>
    %c6_i32_202 = arith.constant 6 : i32
    %311 = tpu.dynamic_rotate %306 by %c6_i32_202 dim 0 : vector<8x256xf32>, i32 -> vector<8x256xf32>
    %c25_203 = arith.constant 25 : index
    %c0_204 = arith.constant 0 : index
    %c0_205 = arith.constant 0 : index
    %312 = vector.load %arg4[%c25_203, %c0_204, %c0_205] : memref<36x8x256xf32, #tpu.memory_space<vmem>>, vector<1x8x256xf32>
    %313 = vector.shape_cast %312 : vector<1x8x256xf32> to vector<8x256xf32>
    %314 = arith.mulf %313, %311 : vector<8x256xf32>
    %315 = arith.addf %310, %314 : vector<8x256xf32>
    %c4_i32_206 = arith.constant 4 : i32
    %316 = tpu.dynamic_rotate %306 by %c4_i32_206 dim 0 : vector<8x256xf32>, i32 -> vector<8x256xf32>
    %c26_207 = arith.constant 26 : index
    %c0_208 = arith.constant 0 : index
    %c0_209 = arith.constant 0 : index
    %317 = vector.load %arg4[%c26_207, %c0_208, %c0_209] : memref<36x8x256xf32, #tpu.memory_space<vmem>>, vector<1x8x256xf32>
    %318 = vector.shape_cast %317 : vector<1x8x256xf32> to vector<8x256xf32>
    %319 = arith.mulf %318, %316 : vector<8x256xf32>
    %320 = arith.addf %315, %319 : vector<8x256xf32>
    %c2_i32_210 = arith.constant 2 : i32
    %321 = tpu.dynamic_rotate %306 by %c2_i32_210 dim 0 : vector<8x256xf32>, i32 -> vector<8x256xf32>
    %c27_211 = arith.constant 27 : index
    %c0_212 = arith.constant 0 : index
    %c0_213 = arith.constant 0 : index
    %322 = vector.load %arg4[%c27_211, %c0_212, %c0_213] : memref<36x8x256xf32, #tpu.memory_space<vmem>>, vector<1x8x256xf32>
    %323 = vector.shape_cast %322 : vector<1x8x256xf32> to vector<8x256xf32>
    %324 = arith.mulf %323, %321 : vector<8x256xf32>
    %325 = arith.addf %320, %324 : vector<8x256xf32>
    %c240_i32_214 = arith.constant 240 : i32
    %326 = tpu.dynamic_rotate %185 by %c240_i32_214 dim 1 : vector<8x256xf32>, i32 -> vector<8x256xf32>
    %c28_215 = arith.constant 28 : index
    %c0_216 = arith.constant 0 : index
    %c0_217 = arith.constant 0 : index
    %327 = vector.load %arg4[%c28_215, %c0_216, %c0_217] : memref<36x8x256xf32, #tpu.memory_space<vmem>>, vector<1x8x256xf32>
    %328 = vector.shape_cast %327 : vector<1x8x256xf32> to vector<8x256xf32>
    %329 = arith.mulf %328, %326 : vector<8x256xf32>
    %330 = arith.addf %325, %329 : vector<8x256xf32>
    %c6_i32_218 = arith.constant 6 : i32
    %331 = tpu.dynamic_rotate %326 by %c6_i32_218 dim 0 : vector<8x256xf32>, i32 -> vector<8x256xf32>
    %c29_219 = arith.constant 29 : index
    %c0_220 = arith.constant 0 : index
    %c0_221 = arith.constant 0 : index
    %332 = vector.load %arg4[%c29_219, %c0_220, %c0_221] : memref<36x8x256xf32, #tpu.memory_space<vmem>>, vector<1x8x256xf32>
    %333 = vector.shape_cast %332 : vector<1x8x256xf32> to vector<8x256xf32>
    %334 = arith.mulf %333, %331 : vector<8x256xf32>
    %335 = arith.addf %330, %334 : vector<8x256xf32>
    %c4_i32_222 = arith.constant 4 : i32
    %336 = tpu.dynamic_rotate %326 by %c4_i32_222 dim 0 : vector<8x256xf32>, i32 -> vector<8x256xf32>
    %c30_223 = arith.constant 30 : index
    %c0_224 = arith.constant 0 : index
    %c0_225 = arith.constant 0 : index
    %337 = vector.load %arg4[%c30_223, %c0_224, %c0_225] : memref<36x8x256xf32, #tpu.memory_space<vmem>>, vector<1x8x256xf32>
    %338 = vector.shape_cast %337 : vector<1x8x256xf32> to vector<8x256xf32>
    %339 = arith.mulf %338, %336 : vector<8x256xf32>
    %340 = arith.addf %335, %339 : vector<8x256xf32>
    %c2_i32_226 = arith.constant 2 : i32
    %341 = tpu.dynamic_rotate %326 by %c2_i32_226 dim 0 : vector<8x256xf32>, i32 -> vector<8x256xf32>
    %c31_227 = arith.constant 31 : index
    %c0_228 = arith.constant 0 : index
    %c0_229 = arith.constant 0 : index
    %342 = vector.load %arg4[%c31_227, %c0_228, %c0_229] : memref<36x8x256xf32, #tpu.memory_space<vmem>>, vector<1x8x256xf32>
    %343 = vector.shape_cast %342 : vector<1x8x256xf32> to vector<8x256xf32>
    %344 = arith.mulf %343, %341 : vector<8x256xf32>
    %345 = arith.addf %340, %344 : vector<8x256xf32>
    %c239_i32_230 = arith.constant 239 : i32
    %346 = tpu.dynamic_rotate %185 by %c239_i32_230 dim 1 : vector<8x256xf32>, i32 -> vector<8x256xf32>
    %c32_231 = arith.constant 32 : index
    %c0_232 = arith.constant 0 : index
    %c0_233 = arith.constant 0 : index
    %347 = vector.load %arg4[%c32_231, %c0_232, %c0_233] : memref<36x8x256xf32, #tpu.memory_space<vmem>>, vector<1x8x256xf32>
    %348 = vector.shape_cast %347 : vector<1x8x256xf32> to vector<8x256xf32>
    %349 = arith.mulf %348, %346 : vector<8x256xf32>
    %350 = arith.addf %345, %349 : vector<8x256xf32>
    %c6_i32_234 = arith.constant 6 : i32
    %351 = tpu.dynamic_rotate %346 by %c6_i32_234 dim 0 : vector<8x256xf32>, i32 -> vector<8x256xf32>
    %c33_235 = arith.constant 33 : index
    %c0_236 = arith.constant 0 : index
    %c0_237 = arith.constant 0 : index
    %352 = vector.load %arg4[%c33_235, %c0_236, %c0_237] : memref<36x8x256xf32, #tpu.memory_space<vmem>>, vector<1x8x256xf32>
    %353 = vector.shape_cast %352 : vector<1x8x256xf32> to vector<8x256xf32>
    %354 = arith.mulf %353, %351 : vector<8x256xf32>
    %355 = arith.addf %350, %354 : vector<8x256xf32>
    %c4_i32_238 = arith.constant 4 : i32
    %356 = tpu.dynamic_rotate %346 by %c4_i32_238 dim 0 : vector<8x256xf32>, i32 -> vector<8x256xf32>
    %c34_239 = arith.constant 34 : index
    %c0_240 = arith.constant 0 : index
    %c0_241 = arith.constant 0 : index
    %357 = vector.load %arg4[%c34_239, %c0_240, %c0_241] : memref<36x8x256xf32, #tpu.memory_space<vmem>>, vector<1x8x256xf32>
    %358 = vector.shape_cast %357 : vector<1x8x256xf32> to vector<8x256xf32>
    %359 = arith.mulf %358, %356 : vector<8x256xf32>
    %360 = arith.addf %355, %359 : vector<8x256xf32>
    %c2_i32_242 = arith.constant 2 : i32
    %361 = tpu.dynamic_rotate %346 by %c2_i32_242 dim 0 : vector<8x256xf32>, i32 -> vector<8x256xf32>
    %c35_243 = arith.constant 35 : index
    %c0_244 = arith.constant 0 : index
    %c0_245 = arith.constant 0 : index
    %362 = vector.load %arg4[%c35_243, %c0_244, %c0_245] : memref<36x8x256xf32, #tpu.memory_space<vmem>>, vector<1x8x256xf32>
    %363 = vector.shape_cast %362 : vector<1x8x256xf32> to vector<8x256xf32>
    %364 = arith.mulf %363, %361 : vector<8x256xf32>
    %365 = arith.addf %360, %364 : vector<8x256xf32>
    %c0_246 = arith.constant 0 : index
    %c0_247 = arith.constant 0 : index
    %366 = vector.load %arg5[%c0_246, %c0_247] : memref<8x256xf32, #tpu.memory_space<vmem>>, vector<8x256xf32>
    %367 = arith.addf %365, %366 : vector<8x256xf32>
    %368 = arith.addf %367, %1 : vector<8x256xf32>
    %cst_248 = arith.constant 0.000000e+00 : f32
    %369 = vector.broadcast %cst_248 : f32 to vector<8x256xf32>
    %370 = arith.maximumf %368, %369 : vector<8x256xf32>
    %c0_249 = arith.constant 0 : index
    %c0_250 = arith.constant 0 : index
    %c0_251 = arith.constant 0 : index
    %371 = vector.load %arg6[%c0_249, %c0_250, %c0_251] : memref<1x8x256xf32, #tpu.memory_space<vmem>>, vector<1x8x256xf32>
    %372 = vector.shape_cast %371 : vector<1x8x256xf32> to vector<8x256xf32>
    %373 = vector.shape_cast %370 : vector<8x256xf32> to vector<1x8x256xf32>
    tpu.vector_store %arg6[%c0_249, %c0_250, %c0_251], %373 {strides = array<i32>} : memref<1x8x256xf32, #tpu.memory_space<vmem>>, vector<1x8x256xf32>,
    return
  }
  func.func @transform_0(%arg0: i32) -> (i32, i32, i32) {
    %c0_i32 = arith.constant 0 : i32
    %c0_i32_0 = arith.constant 0 : i32
    %c0_i32_1 = arith.constant 0 : i32
    return %arg0, %c0_i32, %c0_i32_0 : i32, i32, i32
  }
  func.func @transform_1(%arg0: i32) -> (i32, i32, i32) {
    %c0_i32 = arith.constant 0 : i32
    %c0_i32_0 = arith.constant 0 : i32
    %c0_i32_1 = arith.constant 0 : i32
    %c0_i32_2 = arith.constant 0 : i32
    return %c0_i32, %c0_i32_0, %c0_i32_1 : i32, i32, i32
  }
  func.func @transform_2(%arg0: i32) -> (i32, i32) {
    %c0_i32 = arith.constant 0 : i32
    %c0_i32_0 = arith.constant 0 : i32
    %c0_i32_1 = arith.constant 0 : i32
    return %c0_i32, %c0_i32_0 : i32, i32
  }
  func.func @transform_3(%arg0: i32) -> (i32, i32, i32) {
    %c0_i32 = arith.constant 0 : i32
    %c0_i32_0 = arith.constant 0 : i32
    %c0_i32_1 = arith.constant 0 : i32
    %c0_i32_2 = arith.constant 0 : i32
    return %c0_i32, %c0_i32_0, %c0_i32_1 : i32, i32, i32
  }
  func.func @transform_4(%arg0: i32) -> (i32, i32) {
    %c0_i32 = arith.constant 0 : i32
    %c0_i32_0 = arith.constant 0 : i32
    %c0_i32_1 = arith.constant 0 : i32
    return %c0_i32, %c0_i32_0 : i32, i32
  }
  func.func @transform_5(%arg0: i32) -> (i32, i32, i32) {
    %c0_i32 = arith.constant 0 : i32
    %c0_i32_0 = arith.constant 0 : i32
    %c0_i32_1 = arith.constant 0 : i32
    return %arg0, %c0_i32, %c0_i32_0 : i32, i32, i32
  }
}

</mosaic_0001>

<llo_original>
// kernel: residual_block.1
$region0: #{residual_block.1}
  #allocation0 [shape = 'u32[]', space=smem, size = 0x4, offset = 0x4, fixed_abs, tag = 'smem constant byte address 0x4 - core index']
  #allocation1 [shape = 'u32[144,128]{1,0:T(1,128)}', space=vmem, size = 0x12000, scoped, tag = 'internal scratch']
  %s0 = inlined_call_operand.vmem [shape: f32[2,8,256], index: 0, kind: input, shape index: {}]
  %s1 = inlined_call_operand.vmem [shape: f32[36,8,256], index: 1, kind: input, shape index: {}]
  %s2 = inlined_call_operand.vmem [shape: f32[8,256], index: 2, kind: input, shape index: {}]
  %s3 = inlined_call_operand.vmem [shape: f32[36,8,256], index: 3, kind: input, shape index: {}]
  %s4 = inlined_call_operand.vmem [shape: f32[8,256], index: 4, kind: input, shape index: {}]
  %s5 = inlined_call_operand.vmem [shape: f32[2,8,256], index: 5, kind: output, shape index: {}]
  %s6 = sld [smem:[#allocation0]]
  $region53: #{residual_block.1} parent=0
    _
  %s8 = ssub.s32 1, %s6
  %s9 = scalar_select 0, %s8, %s6
  loop: start=0, step=1, limit=4
  $region2: #{residual_block.1} parent=0 // loop_pre_header
    _
  $region3: #{residual_block.1} parent=0 // loop_header
    %s11 = sphi 0, %s15
    %p12 = scmp.ge.s32.totalorder %s11, 4
    %s21 = sphi 0, %s23
    %s24 = sphi 0, %s21
    %s25 = sphi 0, %s24
    %s41 = sphi 0, %s25
    %s45 = sphi 0, %s45
    %s47 = sphi 0, %s45
    %s48 = sphi 0, %s47
    %s62 = sphi 0, %s48
    %s66 = sphi 0, %s66
    %s68 = sphi 0, %s66
    %s69 = sphi 0, %s68
    %s83 = sphi 0, %s69
    %s87 = sphi 0, %s87
    %s89 = sphi 0, %s87
    %s90 = sphi 0, %s89
    %s104 = sphi 0, %s90
    %s108 = sphi 0, %s108
    %s110 = sphi 0, %s108
    %s111 = sphi 0, %s110
    %s125 = sphi 0, %s111
    %s131 = sphi 0, %s133
    %s134 = sphi 0, %s131
    %s135 = sphi 0, %s134
    %s151 = sphi 0, %s135
  $region4: #{residual_block.1} parent=0 // loop_header_branch
    %14 = sbr.rel (%p12) target = $region8
  $region5: #{residual_block.1} parent=0 // loop_body
    %s16 = ssub.s32 %s11, 1
    %s17 = ssub.s32 %s11, 2
    %s18 = sadd.s32 %s11, 1
    %s19 = ssub.s32 %s11, %s18
    %p20 = scmp.eq.s32.totalorder %s19, 0
    %s22 = sadd.s32 %s21, 1
    %s23 = scalar_select %p20, %s21, %s22
    %p26 = pneg %p20
    %p27 = scmp.eq.s32.totalorder %s11, 1
    %p28 = por %p26, %p27
    %p29 = scmp.ne.s32.totalorder %s21, %s24
    %p30 = scmp.eq.s32.totalorder %s11, 0
    %p31 = por %p29, %p30
    %p32 = scmp.ne.s32.totalorder %s21, %s24
    %p33 = scmp.eq.s32.totalorder %s16, 1
    %p34 = por %p32, %p33
    %p35 = scmp.ne.s32.totalorder %s24, %s25
    %p36 = scmp.eq.s32.totalorder %s16, 0
    %p37 = por %p35, %p36
    %p38 = scmp.ne.s32.totalorder %s24, %s25
    %p39 = scmp.eq.s32.totalorder %s17, 1
    %p40 = por %p38, %p39
    %p42 = scmp.ne.s32.totalorder %s25, %s41
    %p43 = scmp.eq.s32.totalorder %s17, 0
    %p44 = por %p42, %p43
    %s46 = sadd.s32 %s45, 1
    %p49 = scmp.eq.s32.totalorder %s11, 1
    %p50 = scmp.ne.s32.totalorder %s45, %s47
    %p51 = scmp.eq.s32.totalorder %s11, 0
    %p52 = por %p50, %p51
    %p53 = scmp.ne.s32.totalorder %s45, %s47
    %p54 = scmp.eq.s32.totalorder %s16, 1
    %p55 = por %p53, %p54
    %p56 = scmp.ne.s32.totalorder %s47, %s48
    %p57 = scmp.eq.s32.totalorder %s16, 0
    %p58 = por %p56, %p57
    %p59 = scmp.ne.s32.totalorder %s47, %s48
    %p60 = scmp.eq.s32.totalorder %s17, 1
    %p61 = por %p59, %p60
    %p63 = scmp.ne.s32.totalorder %s48, %s62
    %p64 = scmp.eq.s32.totalorder %s17, 0
    %p65 = por %p63, %p64
    %s67 = sadd.s32 %s66, 1
    %p70 = scmp.eq.s32.totalorder %s11, 1
    %p71 = scmp.ne.s32.totalorder %s66, %s68
    %p72 = scmp.eq.s32.totalorder %s11, 0
    %p73 = por %p71, %p72
    %p74 = scmp.ne.s32.totalorder %s66, %s68
    %p75 = scmp.eq.s32.totalorder %s16, 1
    %p76 = por %p74, %p75
    %p77 = scmp.ne.s32.totalorder %s68, %s69
    %p78 = scmp.eq.s32.totalorder %s16, 0
    %p79 = por %p77, %p78
    %p80 = scmp.ne.s32.totalorder %s68, %s69
    %p81 = scmp.eq.s32.totalorder %s17, 1
    %p82 = por %p80, %p81
    %p84 = scmp.ne.s32.totalorder %s69, %s83
    %p85 = scmp.eq.s32.totalorder %s17, 0
    %p86 = por %p84, %p85
    %s88 = sadd.s32 %s87, 1
    %p91 = scmp.eq.s32.totalorder %s11, 1
    %p92 = scmp.ne.s32.totalorder %s87, %s89
    %p93 = scmp.eq.s32.totalorder %s11, 0
    %p94 = por %p92, %p93
    %p95 = scmp.ne.s32.totalorder %s87, %s89
    %p96 = scmp.eq.s32.totalorder %s16, 1
    %p97 = por %p95, %p96
    %p98 = scmp.ne.s32.totalorder %s89, %s90
    %p99 = scmp.eq.s32.totalorder %s16, 0
    %p100 = por %p98, %p99
    %p101 = scmp.ne.s32.totalorder %s89, %s90
    %p102 = scmp.eq.s32.totalorder %s17, 1
    %p103 = por %p101, %p102
    %p105 = scmp.ne.s32.totalorder %s90, %s104
    %p106 = scmp.eq.s32.totalorder %s17, 0
    %p107 = por %p105, %p106
    %s109 = sadd.s32 %s108, 1
    %p112 = scmp.eq.s32.totalorder %s11, 1
    %p113 = scmp.ne.s32.totalorder %s108, %s110
    %p114 = scmp.eq.s32.totalorder %s11, 0
    %p115 = por %p113, %p114
    %p116 = scmp.ne.s32.totalorder %s108, %s110
    %p117 = scmp.eq.s32.totalorder %s16, 1
    %p118 = por %p116, %p117
    %p119 = scmp.ne.s32.totalorder %s110, %s111
    %p120 = scmp.eq.s32.totalorder %s16, 0
    %p121 = por %p119, %p120
    %p122 = scmp.ne.s32.totalorder %s110, %s111
    %p123 = scmp.eq.s32.totalorder %s17, 1
    %p124 = por %p122, %p123
    %p126 = scmp.ne.s32.totalorder %s111, %s125
    %p127 = scmp.eq.s32.totalorder %s17, 0
    %p128 = por %p126, %p127
    %s129 = ssub.s32 %s11, %s18
    %p130 = scmp.eq.s32.totalorder %s129, 0
    %s132 = sadd.s32 %s131, 1
    %s133 = scalar_select %p130, %s131, %s132
    %p136 = pneg %p130
    %p137 = scmp.eq.s32.totalorder %s11, 1
    %p138 = por %p136, %p137
    %p139 = scmp.ne.s32.totalorder %s131, %s134
    %p140 = scmp.eq.s32.totalorder %s11, 0
    %p141 = por %p139, %p140
    %p142 = scmp.ne.s32.totalorder %s131, %s134
    %p143 = scmp.eq.s32.totalorder %s16, 1
    %p144 = por %p142, %p143
    %p145 = scmp.ne.s32.totalorder %s134, %s135
    %p146 = scmp.eq.s32.totalorder %s16, 0
    %p147 = por %p145, %p146
    %p148 = scmp.ne.s32.totalorder %s134, %s135
    %p149 = scmp.eq.s32.totalorder %s17, 1
    %p150 = por %p148, %p149
    %p152 = scmp.ne.s32.totalorder %s135, %s151
    %p153 = scmp.eq.s32.totalorder %s17, 0
    %p154 = por %p152, %p153
    %p155 = scmp.le.s32.totalorder 1, %s11
    %p156 = scmp.lt.s32.totalorder %s11, 3
    %p157 = pnand %p155, %p156
    %p158 = pneg %p157
    // Predicated region
    $region9: #{residual_block.1} parent=5 // pred_check
      _
    $region10: #{residual_block.1} parent=5 // pred_check_branch
      %160 = sbr.rel (%p157) target = $region12
    $region11: #{residual_block.1} parent=5 // pred_region
      %s161 = ssub.s32 %s11, 1
      // Predicated region
      $region13: #{residual_block.1} parent=11 // pred_check
        %p162 = pneg %p58
      $region14: #{residual_block.1} parent=11 // pred_check_branch
        %164 = sbr.rel (%p162) target = $region16
      $region15: #{residual_block.1} parent=11 // pred_region
        _
      $region16: #{residual_block.1} parent=11 // pred_fallthru
        _
      // Predicated region
      $region17: #{residual_block.1} parent=11 // pred_check
        %p165 = pneg %p79
      $region18: #{residual_block.1} parent=11 // pred_check_branch
        %167 = sbr.rel (%p165) target = $region20
      $region19: #{residual_block.1} parent=11 // pred_region
        _
      $region20: #{residual_block.1} parent=11 // pred_fallthru
        _
      // Predicated region
      $region21: #{residual_block.1} parent=11 // pred_check
        %p168 = pneg %p100
      $region22: #{residual_block.1} parent=11 // pred_check_branch
        %170 = sbr.rel (%p168) target = $region24
      $region23: #{residual_block.1} parent=11 // pred_region
        _
      $region24: #{residual_block.1} parent=11 // pred_fallthru
        _
      // Predicated region
      $region25: #{residual_block.1} parent=11 // pred_check
        %p171 = pneg %p121
      $region26: #{residual_block.1} parent=11 // pred_check_branch
        %173 = sbr.rel (%p171) target = $region28
      $region27: #{residual_block.1} parent=11 // pred_region
        _
      $region28: #{residual_block.1} parent=11 // pred_fallthru
        _
    $region12: #{residual_block.1} parent=5 // pred_fallthru
      _
    %p174 = scmp.lt.s32.totalorder %s11, 2
    // Predicated region
    $region29: #{residual_block.1} parent=5 // pred_check
      %p175 = pneg %p174
    $region30: #{residual_block.1} parent=5 // pred_check_branch
      %177 = sbr.rel (%p175) target = $region32
    $region31: #{residual_block.1} parent=5 // pred_region
      // Predicated region
      $region33: #{residual_block.1} parent=31 // pred_check
        %p178 = pneg %p31
      $region34: #{residual_block.1} parent=31 // pred_check_branch
        %180 = sbr.rel (%p178) target = $region36
      $region35: #{residual_block.1} parent=31 // pred_region
        %p181 = scmp.lt.s32.totalorder %s11, 1
        %s182 = scalar_select %p181, %s11, 1
        %s183 = smul.addr %s182, 2
        %s184 = smul.addr %s183, 8
        %s185 = scalar_lea.vmem %s0, %s184
      $region36: #{residual_block.1} parent=31 // pred_fallthru
        _
    $region32: #{residual_block.1} parent=5 // pred_fallthru
      _
    %p186 = scmp.le.s32.totalorder 1, %s11
    %p187 = scmp.lt.s32.totalorder %s11, 3
    %p188 = pnand %p186, %p187
    %p189 = pneg %p188
    // Predicated region
    $region37: #{residual_block.1} parent=5 // pred_check
      _
    $region38: #{residual_block.1} parent=5 // pred_check_branch
      %191 = sbr.rel (%p188) target = $region40
    $region39: #{residual_block.1} parent=5 // pred_region
      %s192 = ssub.s32 %s11, 1
      %p193 = scmp.lt.s32.totalorder %s16, 1
      %s194 = scalar_select %p193, %s16, 1
      %s195 = smul.addr %s194, 2
      %s196 = smul.addr %s195, 8
      %s197 = scalar_lea.vmem %s0, %s196
      %p198 = pneg %p37
      %p199 = pneg %p34
      %p200 = pneg %p58
      %p201 = pneg %p55
      %p202 = pneg %p79
      %p203 = pneg %p76
      %p204 = pneg %p100
      %p205 = pneg %p97
      %p206 = pneg %p121
      %p207 = pneg %p118
      %p208 = pneg %p147
      %p209 = pneg %p144
      %p210 = scmp.lt.s32.totalorder %s16, 1
      %s211 = scalar_select %p210, %s16, 1
      %s212 = smul.addr %s211, 2
      %s213 = smul.addr %s212, 8
      %s214 = scalar_lea.vmem %s5, %s213
      %p215 = scmp.lt.s32.totalorder %s16, 1
      %s216 = scalar_select %p215, %s16, 1
      %s217 = smul.addr %s216, 2
      %s218 = smul.addr %s217, 8
      %s219 = scalar_lea.vmem %s0, %s218
      %p220 = scmp.lt.s32.totalorder %s16, 1
      %s221 = scalar_select %p220, %s16, 1
      %s222 = smul.addr %s221, 2
      %s223 = smul.addr %s222, 8
      %s224 = scalar_lea.vmem %s5, %s223
      %v225 = vld [vmem:[%s219] sm:$0xff]
      %v226 = vld [vmem:[%s219 + $0x8] sm:$0xff]
      %227 = vrot.lane.b32.xlu0 %v225, 17
      %v228 = vpop.permute.xlu0 %227
      %229 = vrot.lane.b32.xlu0 %v226, 17
      %v230 = vpop.permute.xlu0 %229
      %v231 = vlaneseq
      %v232 = vand.u32 %v231, 127
      %vm233 = vcmp.lt.s32.totalorder %v232, 17
      %v234 = vsel %vm233, %v228, %v230
      %v235 = vsel %vm233, %v230, %v228
      %v236 = vld [vmem:[%s1] sm:$0xff]
      %v237 = vld [vmem:[%s1 + $0x8] sm:$0xff]
      %v238 = vmul.f32 %v236, %v235
      %v239 = vmul.f32 %v237, %v234
      %v240 = vadd.f32 %v238, 0.0
      %v241 = vadd.f32 %v239, 0.0
      %v242 = vrot.slane %v235, 2
      %v243 = vrot.slane %v234, 2
      %s244 = scalar_lea.vmem %s1, 16
      %v245 = vld [vmem:[%s244] sm:$0xff]
      %v246 = vld [vmem:[%s244 + $0x8] sm:$0xff]
      %v247 = vmul.f32 %v245, %v242
      %v248 = vmul.f32 %v246, %v243
      %v249 = vadd.f32 %v240, %v247
      %v250 = vadd.f32 %v241, %v248
      %v251 = vrot.slane %v235, 4
      %v252 = vrot.slane %v234, 4
      %s253 = scalar_lea.vmem %s1, 32
      %v254 = vld [vmem:[%s253] sm:$0xff]
      %v255 = vld [vmem:[%s253 + $0x8] sm:$0xff]
      %v256 = vmul.f32 %v254, %v251
      %v257 = vmul.f32 %v255, %v252
      %v258 = vadd.f32 %v249, %v256
      %v259 = vadd.f32 %v250, %v257
      %v260 = vrot.slane %v235, 6
      %v261 = vrot.slane %v234, 6
      %s262 = scalar_lea.vmem %s1, 48
      %v263 = vld [vmem:[%s262] sm:$0xff]
      %v264 = vld [vmem:[%s262 + $0x8] sm:$0xff]
      %v265 = vmul.f32 %v263, %v260
      %v266 = vmul.f32 %v264, %v261
      %v267 = vadd.f32 %v258, %v265
      %v268 = vadd.f32 %v259, %v266
      %269 = vrot.lane.b32.xlu0 %v225, 16
      %v270 = vpop.permute.xlu0 %269
      %271 = vrot.lane.b32.xlu0 %v226, 16
      %v272 = vpop.permute.xlu0 %271
      %vm273 = vcmp.lt.s32.totalorder %v232, 16
      %v274 = vsel %vm273, %v270, %v272
      %v275 = vsel %vm273, %v272, %v270
      %s276 = scalar_lea.vmem %s1, 64
      %v277 = vld [vmem:[%s276] sm:$0xff]
      %v278 = vld [vmem:[%s276 + $0x8] sm:$0xff]
      %v279 = vmul.f32 %v277, %v275
      %v280 = vmul.f32 %v278, %v274
      %v281 = vadd.f32 %v267, %v279
      %v282 = vadd.f32 %v268, %v280
      %v283 = vrot.slane %v275, 2
      %v284 = vrot.slane %v274, 2
      %s285 = scalar_lea.vmem %s1, 80
      %v286 = vld [vmem:[%s285] sm:$0xff]
      %v287 = vld [vmem:[%s285 + $0x8] sm:$0xff]
      %v288 = vmul.f32 %v286, %v283
      %v289 = vmul.f32 %v287, %v284
      %v290 = vadd.f32 %v281, %v288
      %v291 = vadd.f32 %v282, %v289
      %v292 = vrot.slane %v275, 4
      %v293 = vrot.slane %v274, 4
      %s294 = scalar_lea.vmem %s1, 96
      %v295 = vld [vmem:[%s294] sm:$0xff]
      %v296 = vld [vmem:[%s294 + $0x8] sm:$0xff]
      %v297 = vmul.f32 %v295, %v292
      %v298 = vmul.f32 %v296, %v293
      %v299 = vadd.f32 %v290, %v297
      %v300 = vadd.f32 %v291, %v298
      %v301 = vrot.slane %v275, 6
      %v302 = vrot.slane %v274, 6
      %s303 = scalar_lea.vmem %s1, 112
      %v304 = vld [vmem:[%s303] sm:$0xff]
      %v305 = vld [vmem:[%s303 + $0x8] sm:$0xff]
      %v306 = vmul.f32 %v304, %v301
      %v307 = vmul.f32 %v305, %v302
      %v308 = vadd.f32 %v299, %v306
      %v309 = vadd.f32 %v300, %v307
      %310 = vrot.lane.b32.xlu0 %v225, 15
      %v311 = vpop.permute.xlu0 %310
      %312 = vrot.lane.b32.xlu0 %v226, 15
      %v313 = vpop.permute.xlu0 %312
      %vm314 = vcmp.lt.s32.totalorder %v232, 15
      %v315 = vsel %vm314, %v311, %v313
      %v316 = vsel %vm314, %v313, %v311
      %s317 = scalar_lea.vmem %s1, 128
      %v318 = vld [vmem:[%s317] sm:$0xff]
      %v319 = vld [vmem:[%s317 + $0x8] sm:$0xff]
      %v320 = vmul.f32 %v318, %v316
      %v321 = vmul.f32 %v319, %v315
      %v322 = vadd.f32 %v308, %v320
      %v323 = vadd.f32 %v309, %v321
      %v324 = vrot.slane %v316, 2
      %v325 = vrot.slane %v315, 2
      %s326 = scalar_lea.vmem %s1, 144
      %v327 = vld [vmem:[%s326] sm:$0xff]
      %v328 = vld [vmem:[%s326 + $0x8] sm:$0xff]
      %v329 = vmul.f32 %v327, %v324
      %v330 = vmul.f32 %v328, %v325
      %v331 = vadd.f32 %v322, %v329
      %v332 = vadd.f32 %v323, %v330
      %v333 = vrot.slane %v316, 4
      %v334 = vrot.slane %v315, 4
      %s335 = scalar_lea.vmem %s1, 160
      %v336 = vld [vmem:[%s335] sm:$0xff]
      %v337 = vld [vmem:[%s335 + $0x8] sm:$0xff]
      %v338 = vmul.f32 %v336, %v333
      %v339 = vmul.f32 %v337, %v334
      %v340 = vadd.f32 %v331, %v338
      %v341 = vadd.f32 %v332, %v339
      %v342 = vrot.slane %v316, 6
      %v343 = vrot.slane %v315, 6
      %s344 = scalar_lea.vmem %s1, 176
      %v345 = vld [vmem:[%s344] sm:$0xff]
      %v346 = vld [vmem:[%s344 + $0x8] sm:$0xff]
      %v347 = vmul.f32 %v345, %v342
      %v348 = vmul.f32 %v346, %v343
      %v349 = vadd.f32 %v340, %v347
      %v350 = vadd.f32 %v341, %v348
      %351 = vrot.lane.b32.xlu0 %v225, 1
      %v352 = vpop.permute.xlu0 %351
      %353 = vrot.lane.b32.xlu0 %v226, 1
      %v354 = vpop.permute.xlu0 %353
      %vm355 = vcmp.lt.s32.totalorder %v232, 1
      %v356 = vsel %vm355, %v352, %v354
      %v357 = vsel %vm355, %v354, %v352
      %s358 = scalar_lea.vmem %s1, 192
      %v359 = vld [vmem:[%s358] sm:$0xff]
      %v360 = vld [vmem:[%s358 + $0x8] sm:$0xff]
      %v361 = vmul.f32 %v359, %v357
      %v362 = vmul.f32 %v360, %v356
      %v363 = vadd.f32 %v349, %v361
      %v364 = vadd.f32 %v350, %v362
      %v365 = vrot.slane %v357, 2
      %v366 = vrot.slane %v356, 2
      %s367 = scalar_lea.vmem %s1, 208
      %v368 = vld [vmem:[%s367] sm:$0xff]
      %v369 = vld [vmem:[%s367 + $0x8] sm:$0xff]
      %v370 = vmul.f32 %v368, %v365
      %v371 = vmul.f32 %v369, %v366
      %v372 = vadd.f32 %v363, %v370
      %v373 = vadd.f32 %v364, %v371
      %v374 = vrot.slane %v357, 4
      %v375 = vrot.slane %v356, 4
      %s376 = scalar_lea.vmem %s1, 224
      %v377 = vld [vmem:[%s376] sm:$0xff]
      %v378 = vld [vmem:[%s376 + $0x8] sm:$0xff]
      %v379 = vmul.f32 %v377, %v374
      %v380 = vmul.f32 %v378, %v375
      %v381 = vadd.f32 %v372, %v379
      %v382 = vadd.f32 %v373, %v380
      %v383 = vrot.slane %v357, 6
      %v384 = vrot.slane %v356, 6
      %s385 = scalar_lea.vmem %s1, 240
      %v386 = vld [vmem:[%s385] sm:$0xff]
      %v387 = vld [vmem:[%s385 + $0x8] sm:$0xff]
      %v388 = vmul.f32 %v386, %v383
      %v389 = vmul.f32 %v387, %v384
      %v390 = vadd.f32 %v381, %v388
      %v391 = vadd.f32 %v382, %v389
      %s392 = scalar_lea.vmem %s1, 256
      %v393 = vld [vmem:[%s392] sm:$0xff]
      %v394 = vld [vmem:[%s392 + $0x8] sm:$0xff]
      %v395 = vmul.f32 %v393, %v225
      %v396 = vmul.f32 %v394, %v226
      %v397 = vadd.f32 %v390, %v395
      %v398 = vadd.f32 %v391, %v396
      %v399 = vrot.slane %v225, 2
      %v400 = vrot.slane %v226, 2
      %s401 = scalar_lea.vmem %s1, 272
      %v402 = vld [vmem:[%s401] sm:$0xff]
      %v403 = vld [vmem:[%s401 + $0x8] sm:$0xff]
      %v404 = vmul.f32 %v402, %v399
      %v405 = vmul.f32 %v403, %v400
      %v406 = vadd.f32 %v397, %v404
      %v407 = vadd.f32 %v398, %v405
      %v408 = vrot.slane %v225, 4
      %v409 = vrot.slane %v226, 4
      %s410 = scalar_lea.vmem %s1, 288
      %v411 = vld [vmem:[%s410] sm:$0xff]
      %v412 = vld [vmem:[%s410 + $0x8] sm:$0xff]
      %v413 = vmul.f32 %v411, %v408
      %v414 = vmul.f32 %v412, %v409
      %v415 = vadd.f32 %v406, %v413
      %v416 = vadd.f32 %v407, %v414
      %v417 = vrot.slane %v225, 6
      %v418 = vrot.slane %v226, 6
      %s419 = scalar_lea.vmem %s1, 304
      %v420 = vld [vmem:[%s419] sm:$0xff]
      %v421 = vld [vmem:[%s419 + $0x8] sm:$0xff]
      %v422 = vmul.f32 %v420, %v417
      %v423 = vmul.f32 %v421, %v418
      %v424 = vadd.f32 %v415, %v422
      %v425 = vadd.f32 %v416, %v423
      %426 = vrot.lane.b32.xlu0 %v225, 127
      %v427 = vpop.permute.xlu0 %426
      %428 = vrot.lane.b32.xlu0 %v226, 127
      %v429 = vpop.permute.xlu0 %428
      %vm430 = vcmp.lt.s32.totalorder %v232, 127
      %v431 = vsel %vm430, %v427, %v429
      %v432 = vsel %vm430, %v429, %v427
      %s433 = scalar_lea.vmem %s1, 320
      %v434 = vld [vmem:[%s433] sm:$0xff]
      %v435 = vld [vmem:[%s433 + $0x8] sm:$0xff]
      %v436 = vmul.f32 %v434, %v431
      %v437 = vmul.f32 %v435, %v432
      %v438 = vadd.f32 %v424, %v436
      %v439 = vadd.f32 %v425, %v437
      %v440 = vrot.slane %v431, 2
      %v441 = vrot.slane %v432, 2
      %s442 = scalar_lea.vmem %s1, 336
      %v443 = vld [vmem:[%s442] sm:$0xff]
      %v444 = vld [vmem:[%s442 + $0x8] sm:$0xff]
      %v445 = vmul.f32 %v443, %v440
      %v446 = vmul.f32 %v444, %v441
      %v447 = vadd.f32 %v438, %v445
      %v448 = vadd.f32 %v439, %v446
      %v449 = vrot.slane %v431, 4
      %v450 = vrot.slane %v432, 4
      %s451 = scalar_lea.vmem %s1, 352
      %v452 = vld [vmem:[%s451] sm:$0xff]
      %v453 = vld [vmem:[%s451 + $0x8] sm:$0xff]
      %v454 = vmul.f32 %v452, %v449
      %v455 = vmul.f32 %v453, %v450
      %v456 = vadd.f32 %v447, %v454
      %v457 = vadd.f32 %v448, %v455
      %v458 = vrot.slane %v431, 6
      %v459 = vrot.slane %v432, 6
      %s460 = scalar_lea.vmem %s1, 368
      %v461 = vld [vmem:[%s460] sm:$0xff]
      %v462 = vld [vmem:[%s460 + $0x8] sm:$0xff]
      %v463 = vmul.f32 %v461, %v458
      %v464 = vmul.f32 %v462, %v459
      %v465 = vadd.f32 %v456, %v463
      %v466 = vadd.f32 %v457, %v464
      %467 = vrot.lane.b32.xlu0 %v225, 113
      %v468 = vpop.permute.xlu0 %467
      %469 = vrot.lane.b32.xlu0 %v226, 113
      %v470 = vpop.permute.xlu0 %469
      %vm471 = vcmp.lt.s32.totalorder %v232, 113
      %v472 = vsel %vm471, %v468, %v470
      %v473 = vsel %vm471, %v470, %v468
      %s474 = scalar_lea.vmem %s1, 384
      %v475 = vld [vmem:[%s474] sm:$0xff]
      %v476 = vld [vmem:[%s474 + $0x8] sm:$0xff]
      %v477 = vmul.f32 %v475, %v472
      %v478 = vmul.f32 %v476, %v473
      %v479 = vadd.f32 %v465, %v477
      %v480 = vadd.f32 %v466, %v478
      %v481 = vrot.slane %v472, 2
      %v482 = vrot.slane %v473, 2
      %s483 = scalar_lea.vmem %s1, 400
      %v484 = vld [vmem:[%s483] sm:$0xff]
      %v485 = vld [vmem:[%s483 + $0x8] sm:$0xff]
      %v486 = vmul.f32 %v484, %v481
      %v487 = vmul.f32 %v485, %v482
      %v488 = vadd.f32 %v479, %v486
      %v489 = vadd.f32 %v480, %v487
      %v490 = vrot.slane %v472, 4
      %v491 = vrot.slane %v473, 4
      %s492 = scalar_lea.vmem %s1, 416
      %v493 = vld [vmem:[%s492] sm:$0xff]
      %v494 = vld [vmem:[%s492 + $0x8] sm:$0xff]
      %v495 = vmul.f32 %v493, %v490
      %v496 = vmul.f32 %v494, %v491
      %v497 = vadd.f32 %v488, %v495
      %v498 = vadd.f32 %v489, %v496
      %v499 = vrot.slane %v472, 6
      %v500 = vrot.slane %v473, 6
      %s501 = scalar_lea.vmem %s1, 432
      %v502 = vld [vmem:[%s501] sm:$0xff]
      %v503 = vld [vmem:[%s501 + $0x8] sm:$0xff]
      %v504 = vmul.f32 %v502, %v499
      %v505 = vmul.f32 %v503, %v500
      %v506 = vadd.f32 %v497, %v504
      %v507 = vadd.f32 %v498, %v505
      %508 = vrot.lane.b32.xlu0 %v225, 112
      %v509 = vpop.permute.xlu0 %508
      %510 = vrot.lane.b32.xlu0 %v226, 112
      %v511 = vpop.permute.xlu0 %510
      %vm512 = vcmp.lt.s32.totalorder %v232, 112
      %v513 = vsel %vm512, %v509, %v511
      %v514 = vsel %vm512, %v511, %v509
      %s515 = scalar_lea.vmem %s1, 448
      %v516 = vld [vmem:[%s515] sm:$0xff]
      %v517 = vld [vmem:[%s515 + $0x8] sm:$0xff]
      %v518 = vmul.f32 %v516, %v513
      %v519 = vmul.f32 %v517, %v514
      %v520 = vadd.f32 %v506, %v518
      %v521 = vadd.f32 %v507, %v519
      %v522 = vrot.slane %v513, 2
      %v523 = vrot.slane %v514, 2
      %s524 = scalar_lea.vmem %s1, 464
      %v525 = vld [vmem:[%s524] sm:$0xff]
      %v526 = vld [vmem:[%s524 + $0x8] sm:$0xff]
      %v527 = vmul.f32 %v525, %v522
      %v528 = vmul.f32 %v526, %v523
      %v529 = vadd.f32 %v520, %v527
      %v530 = vadd.f32 %v521, %v528
      %v531 = vrot.slane %v513, 4
      %v532 = vrot.slane %v514, 4
      %s533 = scalar_lea.vmem %s1, 480
      %v534 = vld [vmem:[%s533] sm:$0xff]
      %v535 = vld [vmem:[%s533 + $0x8] sm:$0xff]
      %v536 = vmul.f32 %v534, %v531
      %v537 = vmul.f32 %v535, %v532
      %v538 = vadd.f32 %v529, %v536
      %v539 = vadd.f32 %v530, %v537
      %v540 = vrot.slane %v513, 6
      %v541 = vrot.slane %v514, 6
      %s542 = scalar_lea.vmem %s1, 496
      %v543 = vld [vmem:[%s542] sm:$0xff]
      %v544 = vld [vmem:[%s542 + $0x8] sm:$0xff]
      %v545 = vmul.f32 %v543, %v540
      %v546 = vmul.f32 %v544, %v541
      %v547 = vadd.f32 %v538, %v545
      %v548 = vadd.f32 %v539, %v546
      %549 = vrot.lane.b32.xlu0 %v225, 111
      %v550 = vpop.permute.xlu0 %549
      %551 = vrot.lane.b32.xlu0 %v226, 111
      %v552 = vpop.permute.xlu0 %551
      %vm553 = vcmp.lt.s32.totalorder %v232, 111
      %v554 = vsel %vm553, %v550, %v552
      %v555 = vsel %vm553, %v552, %v550
      %s556 = scalar_lea.vmem %s1, 512
      %v557 = vld [vmem:[%s556] sm:$0xff]
      %v558 = vld [vmem:[%s556 + $0x8] sm:$0xff]
      %v559 = vmul.f32 %v557, %v554
      %v560 = vmul.f32 %v558, %v555
      %v561 = vadd.f32 %v547, %v559
      %v562 = vadd.f32 %v548, %v560
      %v563 = vrot.slane %v554, 2
      %v564 = vrot.slane %v555, 2
      %s565 = scalar_lea.vmem %s1, 528
      %v566 = vld [vmem:[%s565] sm:$0xff]
      %v567 = vld [vmem:[%s565 + $0x8] sm:$0xff]
      %v568 = vmul.f32 %v566, %v563
      %v569 = vmul.f32 %v567, %v564
      %v570 = vadd.f32 %v561, %v568
      %v571 = vadd.f32 %v562, %v569
      %v572 = vrot.slane %v554, 4
      %v573 = vrot.slane %v555, 4
      %s574 = scalar_lea.vmem %s1, 544
      %v575 = vld [vmem:[%s574] sm:$0xff]
      %v576 = vld [vmem:[%s574 + $0x8] sm:$0xff]
      %v577 = vmul.f32 %v575, %v572
      %v578 = vmul.f32 %v576, %v573
      %v579 = vadd.f32 %v570, %v577
      %v580 = vadd.f32 %v571, %v578
      %v581 = vrot.slane %v554, 6
      %v582 = vrot.slane %v555, 6
      %s583 = scalar_lea.vmem %s1, 560
      %v584 = vld [vmem:[%s583] sm:$0xff]
      %v585 = vld [vmem:[%s583 + $0x8] sm:$0xff]
      %v586 = vmul.f32 %v584, %v581
      %v587 = vmul.f32 %v585, %v582
      %v588 = vadd.f32 %v579, %v586
      %v589 = vadd.f32 %v580, %v587
      %v590 = vld [vmem:[%s2] sm:$0xff]
      %v591 = vld [vmem:[%s2 + $0x8] sm:$0xff]
      %v592 = vadd.f32 %v588, %v590
      %v593 = vadd.f32 %v589, %v591
      %v594 = vmax.f32 %v592, 0.0
      %v595 = vmax.f32 %v593, 0.0
      %596 = vrot.lane.b32.xlu0 %v594, 17
      %v597 = vpop.permute.xlu0 %596
      %598 = vrot.lane.b32.xlu0 %v595, 17
      %v599 = vpop.permute.xlu0 %598
      %v600 = vsel %vm233, %v597, %v599
      %v601 = vsel %vm233, %v599, %v597
      %v602 = vld [vmem:[%s3] sm:$0xff]
      %v603 = vld [vmem:[%s3 + $0x8] sm:$0xff]
      %v604 = vmul.f32 %v602, %v601
      %v605 = vmul.f32 %v603, %v600
      %v606 = vadd.f32 %v604, 0.0
      %v607 = vadd.f32 %v605, 0.0
      %v608 = vrot.slane %v601, 2
      %v609 = vrot.slane %v600, 2
      %s610 = scalar_lea.vmem %s3, 16
      %v611 = vld [vmem:[%s610] sm:$0xff]
      %v612 = vld [vmem:[%s610 + $0x8] sm:$0xff]
      %v613 = vmul.f32 %v611, %v608
      %v614 = vmul.f32 %v612, %v609
      %v615 = vadd.f32 %v606, %v613
      %v616 = vadd.f32 %v607, %v614
      %v617 = vrot.slane %v601, 4
      %v618 = vrot.slane %v600, 4
      %s619 = scalar_lea.vmem %s3, 32
      %v620 = vld [vmem:[%s619] sm:$0xff]
      %v621 = vld [vmem:[%s619 + $0x8] sm:$0xff]
      %v622 = vmul.f32 %v620, %v617
      %v623 = vmul.f32 %v621, %v618
      %v624 = vadd.f32 %v615, %v622
      %v625 = vadd.f32 %v616, %v623
      %v626 = vrot.slane %v601, 6
      %v627 = vrot.slane %v600, 6
      %s628 = scalar_lea.vmem %s3, 48
      %v629 = vld [vmem:[%s628] sm:$0xff]
      %v630 = vld [vmem:[%s628 + $0x8] sm:$0xff]
      %v631 = vmul.f32 %v629, %v626
      %v632 = vmul.f32 %v630, %v627
      %v633 = vadd.f32 %v624, %v631
      %v634 = vadd.f32 %v625, %v632
      %635 = vrot.lane.b32.xlu0 %v594, 16
      %v636 = vpop.permute.xlu0 %635
      %637 = vrot.lane.b32.xlu0 %v595, 16
      %v638 = vpop.permute.xlu0 %637
      %v639 = vsel %vm273, %v636, %v638
      %v640 = vsel %vm273, %v638, %v636
      %s641 = scalar_lea.vmem %s3, 64
      %v642 = vld [vmem:[%s641] sm:$0xff]
      %v643 = vld [vmem:[%s641 + $0x8] sm:$0xff]
      %v644 = vmul.f32 %v642, %v640
      %v645 = vmul.f32 %v643, %v639
      %v646 = vadd.f32 %v633, %v644
      %v647 = vadd.f32 %v634, %v645
      %v648 = vrot.slane %v640, 2
      %v649 = vrot.slane %v639, 2
      %s650 = scalar_lea.vmem %s3, 80
      %v651 = vld [vmem:[%s650] sm:$0xff]
      %v652 = vld [vmem:[%s650 + $0x8] sm:$0xff]
      %v653 = vmul.f32 %v651, %v648
      %v654 = vmul.f32 %v652, %v649
      %v655 = vadd.f32 %v646, %v653
      %v656 = vadd.f32 %v647, %v654
      %v657 = vrot.slane %v640, 4
      %v658 = vrot.slane %v639, 4
      %s659 = scalar_lea.vmem %s3, 96
      %v660 = vld [vmem:[%s659] sm:$0xff]
      %v661 = vld [vmem:[%s659 + $0x8] sm:$0xff]
      %v662 = vmul.f32 %v660, %v657
      %v663 = vmul.f32 %v661, %v658
      %v664 = vadd.f32 %v655, %v662
      %v665 = vadd.f32 %v656, %v663
      %v666 = vrot.slane %v640, 6
      %v667 = vrot.slane %v639, 6
      %s668 = scalar_lea.vmem %s3, 112
      %v669 = vld [vmem:[%s668] sm:$0xff]
      %v670 = vld [vmem:[%s668 + $0x8] sm:$0xff]
      %v671 = vmul.f32 %v669, %v666
      %v672 = vmul.f32 %v670, %v667
      %v673 = vadd.f32 %v664, %v671
      %v674 = vadd.f32 %v665, %v672
      %675 = vrot.lane.b32.xlu0 %v594, 15
      %v676 = vpop.permute.xlu0 %675
      %677 = vrot.lane.b32.xlu0 %v595, 15
      %v678 = vpop.permute.xlu0 %677
      %v679 = vsel %vm314, %v676, %v678
      %v680 = vsel %vm314, %v678, %v676
      %s681 = scalar_lea.vmem %s3, 128
      %v682 = vld [vmem:[%s681] sm:$0xff]
      %v683 = vld [vmem:[%s681 + $0x8] sm:$0xff]
      %v684 = vmul.f32 %v682, %v680
      %v685 = vmul.f32 %v683, %v679
      %v686 = vadd.f32 %v673, %v684
      %v687 = vadd.f32 %v674, %v685
      %v688 = vrot.slane %v680, 2
      %v689 = vrot.slane %v679, 2
      %s690 = scalar_lea.vmem %s3, 144
      %v691 = vld [vmem:[%s690] sm:$0xff]
      %v692 = vld [vmem:[%s690 + $0x8] sm:$0xff]
      %v693 = vmul.f32 %v691, %v688
      %v694 = vmul.f32 %v692, %v689
      %v695 = vadd.f32 %v686, %v693
      %v696 = vadd.f32 %v687, %v694
      %v697 = vrot.slane %v680, 4
      %v698 = vrot.slane %v679, 4
      %s699 = scalar_lea.vmem %s3, 160
      %v700 = vld [vmem:[%s699] sm:$0xff]
      %v701 = vld [vmem:[%s699 + $0x8] sm:$0xff]
      %v702 = vmul.f32 %v700, %v697
      %v703 = vmul.f32 %v701, %v698
      %v704 = vadd.f32 %v695, %v702
      %v705 = vadd.f32 %v696, %v703
      %v706 = vrot.slane %v680, 6
      %v707 = vrot.slane %v679, 6
      %s708 = scalar_lea.vmem %s3, 176
      %v709 = vld [vmem:[%s708] sm:$0xff]
      %v710 = vld [vmem:[%s708 + $0x8] sm:$0xff]
      %v711 = vmul.f32 %v709, %v706
      %v712 = vmul.f32 %v710, %v707
      %v713 = vadd.f32 %v704, %v711
      %v714 = vadd.f32 %v705, %v712
      %715 = vrot.lane.b32.xlu0 %v594, 1
      %v716 = vpop.permute.xlu0 %715
      %717 = vrot.lane.b32.xlu0 %v595, 1
      %v718 = vpop.permute.xlu0 %717
      %v719 = vsel %vm355, %v716, %v718
      %v720 = vsel %vm355, %v718, %v716
      %s721 = scalar_lea.vmem %s3, 192
      %v722 = vld [vmem:[%s721] sm:$0xff]
      %v723 = vld [vmem:[%s721 + $0x8] sm:$0xff]
      %v724 = vmul.f32 %v722, %v720
      %v725 = vmul.f32 %v723, %v719
      %v726 = vadd.f32 %v713, %v724
      %v727 = vadd.f32 %v714, %v725
      %v728 = vrot.slane %v720, 2
      %v729 = vrot.slane %v719, 2
      %s730 = scalar_lea.vmem %s3, 208
      %v731 = vld [vmem:[%s730] sm:$0xff]
      %v732 = vld [vmem:[%s730 + $0x8] sm:$0xff]
      %v733 = vmul.f32 %v731, %v728
      %v734 = vmul.f32 %v732, %v729
      %v735 = vadd.f32 %v726, %v733
      %v736 = vadd.f32 %v727, %v734
      %v737 = vrot.slane %v720, 4
      %v738 = vrot.slane %v719, 4
      %s739 = scalar_lea.vmem %s3, 224
      %v740 = vld [vmem:[%s739] sm:$0xff]
      %v741 = vld [vmem:[%s739 + $0x8] sm:$0xff]
      %v742 = vmul.f32 %v740, %v737
      %v743 = vmul.f32 %v741, %v738
      %v744 = vadd.f32 %v735, %v742
      %v745 = vadd.f32 %v736, %v743
      %v746 = vrot.slane %v720, 6
      %v747 = vrot.slane %v719, 6
      %s748 = scalar_lea.vmem %s3, 240
      %v749 = vld [vmem:[%s748] sm:$0xff]
      %v750 = vld [vmem:[%s748 + $0x8] sm:$0xff]
      %v751 = vmul.f32 %v749, %v746
      %v752 = vmul.f32 %v750, %v747
      %v753 = vadd.f32 %v744, %v751
      %v754 = vadd.f32 %v745, %v752
      %s755 = scalar_lea.vmem %s3, 256
      %v756 = vld [vmem:[%s755] sm:$0xff]
      %v757 = vld [vmem:[%s755 + $0x8] sm:$0xff]
      %v758 = vmul.f32 %v756, %v594
      %v759 = vmul.f32 %v757, %v595
      %v760 = vadd.f32 %v753, %v758
      %v761 = vadd.f32 %v754, %v759
      %v762 = vrot.slane %v594, 2
      %v763 = vrot.slane %v595, 2
      %s764 = scalar_lea.vmem %s3, 272
      %v765 = vld [vmem:[%s764] sm:$0xff]
      %v766 = vld [vmem:[%s764 + $0x8] sm:$0xff]
      %v767 = vmul.f32 %v765, %v762
      %v768 = vmul.f32 %v766, %v763
      %v769 = vadd.f32 %v760, %v767
      %v770 = vadd.f32 %v761, %v768
      %v771 = vrot.slane %v594, 4
      %v772 = vrot.slane %v595, 4
      %s773 = scalar_lea.vmem %s3, 288
      %v774 = vld [vmem:[%s773] sm:$0xff]
      %v775 = vld [vmem:[%s773 + $0x8] sm:$0xff]
      %v776 = vmul.f32 %v774, %v771
      %v777 = vmul.f32 %v775, %v772
      %v778 = vadd.f32 %v769, %v776
      %v779 = vadd.f32 %v770, %v777
      %v780 = vrot.slane %v594, 6
      %v781 = vrot.slane %v595, 6
      %s782 = scalar_lea.vmem %s3, 304
      %v783 = vld [vmem:[%s782] sm:$0xff]
      %v784 = vld [vmem:[%s782 + $0x8] sm:$0xff]
      %v785 = vmul.f32 %v783, %v780
      %v786 = vmul.f32 %v784, %v781
      %v787 = vadd.f32 %v778, %v785
      %v788 = vadd.f32 %v779, %v786
      %789 = vrot.lane.b32.xlu0 %v594, 127
      %v790 = vpop.permute.xlu0 %789
      %791 = vrot.lane.b32.xlu0 %v595, 127
      %v792 = vpop.permute.xlu0 %791
      %v793 = vsel %vm430, %v790, %v792
      %v794 = vsel %vm430, %v792, %v790
      %s795 = scalar_lea.vmem %s3, 320
      %v796 = vld [vmem:[%s795] sm:$0xff]
      %v797 = vld [vmem:[%s795 + $0x8] sm:$0xff]
      %v798 = vmul.f32 %v796, %v793
      %v799 = vmul.f32 %v797, %v794
      %v800 = vadd.f32 %v787, %v798
      %v801 = vadd.f32 %v788, %v799
      %v802 = vrot.slane %v793, 2
      %v803 = vrot.slane %v794, 2
      %s804 = scalar_lea.vmem %s3, 336
      %v805 = vld [vmem:[%s804] sm:$0xff]
      %v806 = vld [vmem:[%s804 + $0x8] sm:$0xff]
      %v807 = vmul.f32 %v805, %v802
      %v808 = vmul.f32 %v806, %v803
      %v809 = vadd.f32 %v800, %v807
      %v810 = vadd.f32 %v801, %v808
      %v811 = vrot.slane %v793, 4
      %v812 = vrot.slane %v794, 4
      %s813 = scalar_lea.vmem %s3, 352
      %v814 = vld [vmem:[%s813] sm:$0xff]
      %v815 = vld [vmem:[%s813 + $0x8] sm:$0xff]
      %v816 = vmul.f32 %v814, %v811
      %v817 = vmul.f32 %v815, %v812
      %v818 = vadd.f32 %v809, %v816
      %v819 = vadd.f32 %v810, %v817
      %v820 = vrot.slane %v793, 6
      %v821 = vrot.slane %v794, 6
      %s822 = scalar_lea.vmem %s3, 368
      %v823 = vld [vmem:[%s822] sm:$0xff]
      %v824 = vld [vmem:[%s822 + $0x8] sm:$0xff]
      %v825 = vmul.f32 %v823, %v820
      %v826 = vmul.f32 %v824, %v821
      %v827 = vadd.f32 %v818, %v825
      %v828 = vadd.f32 %v819, %v826
      %829 = vrot.lane.b32.xlu0 %v594, 113
      %v830 = vpop.permute.xlu0 %829
      %831 = vrot.lane.b32.xlu0 %v595, 113
      %v832 = vpop.permute.xlu0 %831
      %v833 = vsel %vm471, %v830, %v832
      %v834 = vsel %vm471, %v832, %v830
      %s835 = scalar_lea.vmem %s3, 384
      %v836 = vld [vmem:[%s835] sm:$0xff]
      %v837 = vld [vmem:[%s835 + $0x8] sm:$0xff]
      %v838 = vmul.f32 %v836, %v833
      %v839 = vmul.f32 %v837, %v834
      %v840 = vadd.f32 %v827, %v838
      %v841 = vadd.f32 %v828, %v839
      %v842 = vrot.slane %v833, 2
      %v843 = vrot.slane %v834, 2
      %s844 = scalar_lea.vmem %s3, 400
      %v845 = vld [vmem:[%s844] sm:$0xff]
      %v846 = vld [vmem:[%s844 + $0x8] sm:$0xff]
      %v847 = vmul.f32 %v845, %v842
      %v848 = vmul.f32 %v846, %v843
      %v849 = vadd.f32 %v840, %v847
      %v850 = vadd.f32 %v841, %v848
      %v851 = vrot.slane %v833, 4
      %v852 = vrot.slane %v834, 4
      %s853 = scalar_lea.vmem %s3, 416
      %v854 = vld [vmem:[%s853] sm:$0xff]
      %v855 = vld [vmem:[%s853 + $0x8] sm:$0xff]
      %v856 = vmul.f32 %v854, %v851
      %v857 = vmul.f32 %v855, %v852
      %v858 = vadd.f32 %v849, %v856
      %v859 = vadd.f32 %v850, %v857
      %v860 = vrot.slane %v833, 6
      %v861 = vrot.slane %v834, 6
      %s862 = scalar_lea.vmem %s3, 432
      %v863 = vld [vmem:[%s862] sm:$0xff]
      %v864 = vld [vmem:[%s862 + $0x8] sm:$0xff]
      %v865 = vmul.f32 %v863, %v860
      %v866 = vmul.f32 %v864, %v861
      %v867 = vadd.f32 %v858, %v865
      %v868 = vadd.f32 %v859, %v866
      %869 = vrot.lane.b32.xlu0 %v594, 112
      %v870 = vpop.permute.xlu0 %869
      %871 = vrot.lane.b32.xlu0 %v595, 112
      %v872 = vpop.permute.xlu0 %871
      %v873 = vsel %vm512, %v870, %v872
      %v874 = vsel %vm512, %v872, %v870
      %s875 = scalar_lea.vmem %s3, 448
      %v876 = vld [vmem:[%s875] sm:$0xff]
      %v877 = vld [vmem:[%s875 + $0x8] sm:$0xff]
      %v878 = vmul.f32 %v876, %v873
      %v879 = vmul.f32 %v877, %v874
      %v880 = vadd.f32 %v867, %v878
      %v881 = vadd.f32 %v868, %v879
      %v882 = vrot.slane %v873, 2
      %v883 = vrot.slane %v874, 2
      %s884 = scalar_lea.vmem %s3, 464
      %v885 = vld [vmem:[%s884] sm:$0xff]
      %v886 = vld [vmem:[%s884 + $0x8] sm:$0xff]
      %v887 = vmul.f32 %v885, %v882
      %v888 = vmul.f32 %v886, %v883
      %v889 = vadd.f32 %v880, %v887
      %v890 = vadd.f32 %v881, %v888
      %v891 = vrot.slane %v873, 4
      %v892 = vrot.slane %v874, 4
      %s893 = scalar_lea.vmem %s3, 480
      %v894 = vld [vmem:[%s893] sm:$0xff]
      %v895 = vld [vmem:[%s893 + $0x8] sm:$0xff]
      %v896 = vmul.f32 %v894, %v891
      %v897 = vmul.f32 %v895, %v892
      %v898 = vadd.f32 %v889, %v896
      %v899 = vadd.f32 %v890, %v897
      %v900 = vrot.slane %v873, 6
      %v901 = vrot.slane %v874, 6
      %s902 = scalar_lea.vmem %s3, 496
      %v903 = vld [vmem:[%s902] sm:$0xff]
      %v904 = vld [vmem:[%s902 + $0x8] sm:$0xff]
      %v905 = vmul.f32 %v903, %v900
      %v906 = vmul.f32 %v904, %v901
      %v907 = vadd.f32 %v898, %v905
      %v908 = vadd.f32 %v899, %v906
      %909 = vrot.lane.b32.xlu0 %v594, 111
      %v910 = vpop.permute.xlu0 %909
      %911 = vrot.lane.b32.xlu0 %v595, 111
      %v912 = vpop.permute.xlu0 %911
      %v913 = vsel %vm553, %v910, %v912
      %v914 = vsel %vm553, %v912, %v910
      %s915 = scalar_lea.vmem %s3, 512
      %v916 = vld [vmem:[%s915] sm:$0xff]
      %v917 = vld [vmem:[%s915 + $0x8] sm:$0xff]
      %v918 = vmul.f32 %v916, %v913
      %v919 = vmul.f32 %v917, %v914
      %v920 = vadd.f32 %v907, %v918
      %v921 = vadd.f32 %v908, %v919
      %v922 = vrot.slane %v913, 2
      %v923 = vrot.slane %v914, 2
      %s924 = scalar_lea.vmem %s3, 528
      %v925 = vld [vmem:[%s924] sm:$0xff]
      %v926 = vld [vmem:[%s924 + $0x8] sm:$0xff]
      %v927 = vmul.f32 %v925, %v922
      %v928 = vmul.f32 %v926, %v923
      %v929 = vadd.f32 %v920, %v927
      %v930 = vadd.f32 %v921, %v928
      %v931 = vrot.slane %v913, 4
      %v932 = vrot.slane %v914, 4
      %s933 = scalar_lea.vmem %s3, 544
      %v934 = vld [vmem:[%s933] sm:$0xff]
      %v935 = vld [vmem:[%s933 + $0x8] sm:$0xff]
      %v936 = vmul.f32 %v934, %v931
      %v937 = vmul.f32 %v935, %v932
      %v938 = vadd.f32 %v929, %v936
      %v939 = vadd.f32 %v930, %v937
      %v940 = vrot.slane %v913, 6
      %v941 = vrot.slane %v914, 6
      %s942 = scalar_lea.vmem %s3, 560
      %v943 = vld [vmem:[%s942] sm:$0xff]
      %v944 = vld [vmem:[%s942 + $0x8] sm:$0xff]
      %v945 = vmul.f32 %v943, %v940
      %v946 = vmul.f32 %v944, %v941
      %v947 = vadd.f32 %v938, %v945
      %v948 = vadd.f32 %v939, %v946
      %v949 = vld [vmem:[%s4] sm:$0xff]
      %v950 = vld [vmem:[%s4 + $0x8] sm:$0xff]
      %v951 = vadd.f32 %v947, %v949
      %v952 = vadd.f32 %v948, %v950
      %v953 = vadd.f32 %v951, %v225
      %v954 = vadd.f32 %v952, %v226
      %v955 = vmax.f32 %v953, 0.0
      %v956 = vmax.f32 %v954, 0.0
      %957 = vst [vmem:[%s224] sm:$0xff] %v955
      %958 = vst [vmem:[%s224 + $0x8] sm:$0xff] %v956
      %p959 = scmp.lt.s32.totalorder %s16, 1
      %s960 = scalar_select %p959, %s16, 1
      %s961 = smul.addr %s960, 2
      %s962 = smul.addr %s961, 8
      %s963 = scalar_lea.vmem %s5, %s962
      // Predicated region
      $region41: #{residual_block.1} parent=39 // pred_check
        %p964 = pneg %p144
      $region42: #{residual_block.1} parent=39 // pred_check_branch
        %966 = sbr.rel (%p964) target = $region44
      $region43: #{residual_block.1} parent=39 // pred_region
        _
      $region44: #{residual_block.1} parent=39 // pred_fallthru
        _
    $region40: #{residual_block.1} parent=5 // pred_fallthru
      _
    %p967 = scmp.le.s32.totalorder 2, %s11
    // Predicated region
    $region45: #{residual_block.1} parent=5 // pred_check
      %p968 = pneg %p967
    $region46: #{residual_block.1} parent=5 // pred_check_branch
      %970 = sbr.rel (%p968) target = $region48
    $region47: #{residual_block.1} parent=5 // pred_region
      %s971 = ssub.s32 %s11, 2
      // Predicated region
      $region49: #{residual_block.1} parent=47 // pred_check
        %p972 = pneg %p150
      $region50: #{residual_block.1} parent=47 // pred_check_branch
        %974 = sbr.rel (%p972) target = $region52
      $region51: #{residual_block.1} parent=47 // pred_region
        %p975 = scmp.lt.s32.totalorder %s17, 1
        %s976 = scalar_select %p975, %s17, 1
        %s977 = smul.addr %s976, 2
        %s978 = smul.addr %s977, 8
        %s979 = scalar_lea.vmem %s5, %s978
      $region52: #{residual_block.1} parent=47 // pred_fallthru
        _
    $region48: #{residual_block.1} parent=5 // pred_fallthru
      _
  $region6: #{residual_block.1} parent=0 // loop_footer
    %s15 = sadd.s32 1, %s11
  $region7: #{residual_block.1} parent=0 // loop_footer_branch
    %10 = sbr.rel target = $region3
  $region8: #{residual_block.1} parent=0 // loop_exit
    _

</llo_original>
